<compile_context>
chip_gen: v7x
topology: tpu7x:2x2x1
jax: 0.10.0
libtpu: 0.0.40
codegen_flags: <defaults>
</compile_context>

<pallas_src>
import jax
import jax.numpy as jnp
from jax import lax
from jax.experimental import pallas as pl
from jax.experimental.pallas import tpu as pltpu


# ----------------------------- fused kernel --------------------------------

def _make_fused_lstm_kernel(num_layers, seq_len, batch, hidden):
    L, S, B, H = num_layers, seq_len, batch, hidden

    def kernel(*refs):
        # refs layout:
        #   x_ref (S*B, E), wx0 (E, 4H), wh0 (H, 4H), b0 (1, 4H),
        #   [wcat_1 (2H, 4H), b_1 (1, 4H), ..., wcat_{L-1}, b_{L-1}],
        #   out_ref (S*B, H), state_ref (2*L*B, H)
        x_ref, wx0_ref, wh0_ref, b0_ref = refs[:4]
        deep_refs = refs[4:4 + 2 * (L - 1)]
        out_ref, state_ref = refs[4 + 2 * (L - 1):]

        # Hoisted layer-0 input projection for ALL timesteps at once
        # (embed Linear already folded into wx0 / b0).
        xg0 = (
            jnp.dot(x_ref[...], wx0_ref[...],
                    preferred_element_type=jnp.float32)
            + b0_ref[...]
        )                                                        # (S*B, 4H)

        wh0 = wh0_ref[...]                                       # (H, 4H)
        wcat = [deep_refs[2 * i][...] for i in range(L - 1)]     # (2H, 4H)
        bdeep = [deep_refs[2 * i + 1][...] for i in range(L - 1)]  # (1, 4H)

        h = [jnp.zeros((B, H), jnp.float32) for _ in range(L)]
        c = [jnp.zeros((B, H), jnp.float32) for _ in range(L)]
        h_seq = [[None] * S for _ in range(L)]

        def cell(g, h_prev, c_prev):
            # Whole-vreg nonlinearities: one sigmoid and one tanh over the
            # full (B, 4H) gate vector, then lane slices per gate.
            sg = jax.nn.sigmoid(g)
            tg = jnp.tanh(g)
            i_g = sg[:, 0 * H:1 * H]
            f_g = sg[:, 1 * H:2 * H]
            o_g = sg[:, 3 * H:4 * H]
            g_g = tg[:, 2 * H:3 * H]
            c_new = f_g * c_prev + i_g * g_g
            h_new = o_g * jnp.tanh(c_new)
            return h_new, c_new

        # Wavefront/diagonal schedule over (layer, time): at diagonal d,
        # layer l runs timestep t = d - l; steps within one diagonal are
        # independent, so their matmuls can overlap in the MXU.
        # TODO(synk): switch the unrolled diagonals to lax.fori_loop once
        #             S*L grows large (live-range / compile-time control).
        for d in range(S + L - 1):
            for l in range(L):
                t = d - l
                if t < 0 or t >= S:
                    continue
                if l == 0:
                    g = xg0[t * B:(t + 1) * B, :] + jnp.dot(
                        h[0], wh0, preferred_element_type=jnp.float32)
                else:
                    inp = jnp.concatenate([h_seq[l - 1][t], h[l]], axis=-1)
                    g = jnp.dot(inp, wcat[l - 1],
                                preferred_element_type=jnp.float32) + bdeep[l - 1]
                h[l], c[l] = cell(g, h[l], c[l])
                h_seq[l][t] = h[l]

        # Single batched stores (no per-timestep masked partial stores).
        out_ref[...] = jnp.concatenate(h_seq[L - 1], axis=0)      # (S*B, H)
        state_ref[...] = jnp.concatenate(h + c, axis=0)           # (2*L*B, H)

    return kernel


# ----------------------------- wrapper --------------------------------------

def _fold_and_pack_params(params):
    """Fold embed Linear into layer 0; pre-transpose / stack all weights."""
    emb_w, emb_b = params["embed"]                       # (I, E), (I,)
    w_ih0, w_hh0, b_ih0, b_hh0 = params["lstm"][0]
    four_h = w_ih0.shape[0]
    flat = [
        (w_ih0 @ emb_w).T,                                        # (E, 4H)
        w_hh0.T,                                                  # (H, 4H)
        (w_ih0 @ emb_b + b_ih0 + b_hh0).reshape(1, four_h),       # (1, 4H)
    ]
    for (w_ih, w_hh, b_ih, b_hh) in params["lstm"][1:]:
        # Stacked [W_ih^T ; W_hh^T] so each deep-layer step is one matmul.
        flat.append(jnp.concatenate([w_ih.T, w_hh.T], axis=0))    # (2H, 4H)
        flat.append((b_ih + b_hh).reshape(1, four_h))             # (1, 4H)
    return flat
    # TODO(synk): store these in bf16 (matmul operands) once H/B scale;
    #             irrelevant at H=32 and it would loosen tolerances.


@jax.jit
def lstm_model_forward(params, x):
    """x: (seq, batch, embed_in) -> (output (seq, batch, H), (h_n, c_n))."""
    S, B, E = x.shape
    L = len(params["lstm"])
    H = params["lstm"][0][1].shape[1]

    flat_w = _fold_and_pack_params(params)
    kernel = _make_fused_lstm_kernel(L, S, B, H)

    vmem_spec = pl.BlockSpec(memory_space=pltpu.MemorySpace.VMEM)
    num_inputs = 1 + len(flat_w)

    out, state = pl.pallas_call(
        kernel,
        out_shape=(
            jax.ShapeDtypeStruct((S * B, H), jnp.float32),
            jax.ShapeDtypeStruct((2 * L * B, H), jnp.float32),
        ),
        in_specs=[vmem_spec] * num_inputs,
        out_specs=(vmem_spec, vmem_spec),
        compiler_params=pltpu.CompilerParams(
            vmem_limit_bytes=32 * 1024 * 1024),
    )(x.reshape(S * B, E), *flat_w)

    state = state.reshape(2, L, B, H)
    return out.reshape(S, B, H), (state[0], state[1])


# ----------------------------- pure-JAX reference ---------------------------

def lstm_model_reference(params, x):
    S, B, E = x.shape
    emb_w, emb_b = params["embed"]
    h = (x.reshape(S * B, E) @ emb_w.T + emb_b).reshape(S, B, emb_w.shape[0])

    h_ns, c_ns = [], []
    layer_in = h
    for (w_ih, w_hh, b_ih, b_hh) in params["lstm"]:
        H = w_hh.shape[1]

        def step(carry, x_t, w_ih=w_ih, w_hh=w_hh, b_ih=b_ih, b_hh=b_hh, H=H):
            h_prev, c_prev = carry
            gates = x_t @ w_ih.T + h_prev @ w_hh.T + b_ih + b_hh
            i = jax.nn.sigmoid(gates[:, 0 * H:1 * H])
            f = jax.nn.sigmoid(gates[:, 1 * H:2 * H])
            g = jnp.tanh(gates[:, 2 * H:3 * H])
            o = jax.nn.sigmoid(gates[:, 3 * H:4 * H])
            c = f * c_prev + i * g
            hh = o * jnp.tanh(c)
            return (hh, c), hh

        init = (jnp.zeros((B, H), jnp.float32), jnp.zeros((B, H), jnp.float32))
        (h_n, c_n), out = lax.scan(step, init, layer_in)
        h_ns.append(h_n)
        c_ns.append(c_n)
        layer_in = out
    return layer_in, (jnp.stack(h_ns, 0), jnp.stack(c_ns, 0))


# ----------------------------- params & main --------------------------------

def init_params(key, embed_in, input_size, hidden_size, num_layers):
    keys = jax.random.split(key, 2 + 4 * num_layers)
    k = 1.0 / jnp.sqrt(hidden_size)
    params = {
        "embed": (
            jax.random.uniform(keys[0], (input_size, embed_in), jnp.float32, -k, k),
            jax.random.uniform(keys[1], (input_size,), jnp.float32, -k, k),
        ),
        "lstm": [],
    }
    for layer in range(num_layers):
        in_dim = input_size if layer == 0 else hidden_size
        kk = keys[2 + 4 * layer: 2 + 4 * (layer + 1)]
        params["lstm"].append((
            jax.random.uniform(kk[0], (4 * hidden_size, in_dim), jnp.float32, -k, k),
            jax.random.uniform(kk[1], (4 * hidden_size, hidden_size), jnp.float32, -k, k),
            jax.random.uniform(kk[2], (4 * hidden_size,), jnp.float32, -k, k),
            jax.random.uniform(kk[3], (4 * hidden_size,), jnp.float32, -k, k),
        ))
    return params


if __name__ == "__main__":
    SEQ, BATCH = 8, 2
    EMBED_IN, INPUT_SIZE, HIDDEN, NUM_LAYERS = 16, 32, 32, 2

    root = jax.random.PRNGKey(0)
    k_x, k_p = jax.random.split(root)

    x = jax.random.normal(k_x, (SEQ, BATCH, EMBED_IN), jnp.float32)
    params = init_params(k_p, EMBED_IN, INPUT_SIZE, HIDDEN, NUM_LAYERS)

    out, (h_n, c_n) = lstm_model_forward(params, x)
    jax.block_until_ready((out, h_n, c_n))

    ref_out, (ref_h, ref_c) = lstm_model_reference(params, x)
    assert out.shape == (SEQ, BATCH, HIDDEN)
    assert h_n.shape == (NUM_LAYERS, BATCH, HIDDEN)
    assert c_n.shape == (NUM_LAYERS, BATCH, HIDDEN)
    # Slightly relaxed tolerance: embed fold + stacked deep-layer weights
    # change f32 summation association order (exact math otherwise).
    assert jnp.allclose(out, ref_out, atol=5e-5, rtol=5e-5)
    assert jnp.allclose(h_n, ref_h, atol=5e-5, rtol=5e-5)
    assert jnp.allclose(c_n, ref_c, atol=5e-5, rtol=5e-5)

    print("KERNEL_OK")
</pallas_src>

<mosaic_0001>
module attributes {stable_mosaic.version = 11 : i64} {
  func.func @kernel(%arg0: memref<16x16xf32, #tpu.memory_space<vmem>>, %arg1: memref<16x128xf32, #tpu.memory_space<vmem>>, %arg2: memref<32x128xf32, #tpu.memory_space<vmem>>, %arg3: memref<1x128xf32, #tpu.memory_space<vmem>>, %arg4: memref<64x128xf32, #tpu.memory_space<vmem>>, %arg5: memref<1x128xf32, #tpu.memory_space<vmem>>, %arg6: memref<16x32xf32, #tpu.memory_space<vmem>>, %arg7: memref<8x32xf32, #tpu.memory_space<vmem>>) attributes {dimension_semantics = [], scalar_prefetch = 0 : i64, scratch_operands = 0 : i64, tpu.core_type = #tpu.core_type<tc>} {
    %c0 = arith.constant 0 : index
    %c0_0 = arith.constant 0 : index
    %0 = vector.load %arg0[%c0, %c0_0] : memref<16x16xf32, #tpu.memory_space<vmem>>, vector<16x16xf32>
    %c0_1 = arith.constant 0 : index
    %c0_2 = arith.constant 0 : index
    %1 = vector.load %arg1[%c0_1, %c0_2] : memref<16x128xf32, #tpu.memory_space<vmem>>, vector<16x128xf32>
    %cst = arith.constant dense<0.000000e+00> : vector<16x128xf32>
    %2 = tpu.matmul %0, %1, %cst {dimension_numbers = #tpu.dot_dimension_numbers<[1], [0], [0], [1], [0, 0, 1, 1], [], []>} : vector<16x16xf32>, vector<16x128xf32>, vector<16x128xf32> -> vector<16x128xf32>
    %c0_3 = arith.constant 0 : index
    %c0_4 = arith.constant 0 : index
    %3 = vector.load %arg3[%c0_3, %c0_4] : memref<1x128xf32, #tpu.memory_space<vmem>>, vector<1x128xf32>
    %4 = vector.broadcast %3 : vector<1x128xf32> to vector<16x128xf32>
    %5 = arith.addf %2, %4 : vector<16x128xf32>
    %c0_5 = arith.constant 0 : index
    %c0_6 = arith.constant 0 : index
    %6 = vector.load %arg2[%c0_5, %c0_6] : memref<32x128xf32, #tpu.memory_space<vmem>>, vector<32x128xf32>
    %c0_7 = arith.constant 0 : index
    %c0_8 = arith.constant 0 : index
    %7 = vector.load %arg4[%c0_7, %c0_8] : memref<64x128xf32, #tpu.memory_space<vmem>>, vector<64x128xf32>
    %c0_9 = arith.constant 0 : index
    %c0_10 = arith.constant 0 : index
    %8 = vector.load %arg5[%c0_9, %c0_10] : memref<1x128xf32, #tpu.memory_space<vmem>>, vector<1x128xf32>
    %cst_11 = arith.constant 0.000000e+00 : f32
    %9 = vector.broadcast %cst_11 : f32 to vector<2x32xf32>
    %cst_12 = arith.constant 0.000000e+00 : f32
    %10 = vector.broadcast %cst_12 : f32 to vector<2x32xf32>
    %cst_13 = arith.constant 0.000000e+00 : f32
    %11 = vector.broadcast %cst_13 : f32 to vector<2x32xf32>
    %cst_14 = arith.constant 0.000000e+00 : f32
    %12 = vector.broadcast %cst_14 : f32 to vector<2x32xf32>
    %13 = vector.extract_strided_slice %5 {offsets = [0, 0], sizes = [2, 128], strides = [1, 1]} : vector<16x128xf32> to vector<2x128xf32>
    %cst_15 = arith.constant dense<0.000000e+00> : vector<2x128xf32>
    %14 = tpu.matmul %9, %6, %cst_15 {dimension_numbers = #tpu.dot_dimension_numbers<[1], [0], [0], [1], [0, 0, 1, 1], [], []>} : vector<2x32xf32>, vector<32x128xf32>, vector<2x128xf32> -> vector<2x128xf32>
    %15 = arith.addf %13, %14 : vector<2x128xf32>
    %16 = arith.negf %15 : vector<2x128xf32>
    %17 = math.exp %16 : vector<2x128xf32>
    %cst_16 = arith.constant 1.000000e+00 : f32
    %18 = vector.broadcast %cst_16 : f32 to vector<2x128xf32>
    %19 = arith.addf %18, %17 : vector<2x128xf32>
    %20 = arith.divf %18, %19 : vector<2x128xf32>
    %21 = math.tanh %15 : vector<2x128xf32>
    %22 = vector.extract_strided_slice %20 {offsets = [0, 0], sizes = [2, 32], strides = [1, 1]} : vector<2x128xf32> to vector<2x32xf32>
    %23 = vector.extract_strided_slice %20 {offsets = [0, 32], sizes = [2, 32], strides = [1, 1]} : vector<2x128xf32> to vector<2x32xf32>
    %24 = vector.extract_strided_slice %20 {offsets = [0, 96], sizes = [2, 32], strides = [1, 1]} : vector<2x128xf32> to vector<2x32xf32>
    %25 = vector.extract_strided_slice %21 {offsets = [0, 64], sizes = [2, 32], strides = [1, 1]} : vector<2x128xf32> to vector<2x32xf32>
    %26 = arith.mulf %23, %11 : vector<2x32xf32>
    %27 = arith.mulf %22, %25 : vector<2x32xf32>
    %28 = arith.addf %26, %27 : vector<2x32xf32>
    %29 = math.tanh %28 : vector<2x32xf32>
    %30 = arith.mulf %24, %29 : vector<2x32xf32>
    %31 = vector.extract_strided_slice %5 {offsets = [2, 0], sizes = [2, 128], strides = [1, 1]} : vector<16x128xf32> to vector<2x128xf32>
    %cst_17 = arith.constant dense<0.000000e+00> : vector<2x128xf32>
    %32 = tpu.matmul %30, %6, %cst_17 {dimension_numbers = #tpu.dot_dimension_numbers<[1], [0], [0], [1], [0, 0, 1, 1], [], []>} : vector<2x32xf32>, vector<32x128xf32>, vector<2x128xf32> -> vector<2x128xf32>
    %33 = arith.addf %31, %32 : vector<2x128xf32>
    %34 = arith.negf %33 : vector<2x128xf32>
    %35 = math.exp %34 : vector<2x128xf32>
    %cst_18 = arith.constant 1.000000e+00 : f32
    %36 = vector.broadcast %cst_18 : f32 to vector<2x128xf32>
    %37 = arith.addf %36, %35 : vector<2x128xf32>
    %38 = arith.divf %36, %37 : vector<2x128xf32>
    %39 = math.tanh %33 : vector<2x128xf32>
    %40 = vector.extract_strided_slice %38 {offsets = [0, 0], sizes = [2, 32], strides = [1, 1]} : vector<2x128xf32> to vector<2x32xf32>
    %41 = vector.extract_strided_slice %38 {offsets = [0, 32], sizes = [2, 32], strides = [1, 1]} : vector<2x128xf32> to vector<2x32xf32>
    %42 = vector.extract_strided_slice %38 {offsets = [0, 96], sizes = [2, 32], strides = [1, 1]} : vector<2x128xf32> to vector<2x32xf32>
    %43 = vector.extract_strided_slice %39 {offsets = [0, 64], sizes = [2, 32], strides = [1, 1]} : vector<2x128xf32> to vector<2x32xf32>
    %44 = arith.mulf %41, %28 : vector<2x32xf32>
    %45 = arith.mulf %40, %43 : vector<2x32xf32>
    %46 = arith.addf %44, %45 : vector<2x32xf32>
    %47 = math.tanh %46 : vector<2x32xf32>
    %48 = arith.mulf %42, %47 : vector<2x32xf32>
    %49 = tpu.concatenate %30, %10 in 1 : vector<2x32xf32>, vector<2x32xf32> -> vector<2x64xf32>
    %cst_19 = arith.constant dense<0.000000e+00> : vector<2x128xf32>
    %50 = tpu.matmul %49, %7, %cst_19 {dimension_numbers = #tpu.dot_dimension_numbers<[1], [0], [0], [1], [0, 0, 1, 1], [], []>} : vector<2x64xf32>, vector<64x128xf32>, vector<2x128xf32> -> vector<2x128xf32>
    %51 = vector.broadcast %8 : vector<1x128xf32> to vector<2x128xf32>
    %52 = arith.addf %50, %51 : vector<2x128xf32>
    %53 = arith.negf %52 : vector<2x128xf32>
    %54 = math.exp %53 : vector<2x128xf32>
    %cst_20 = arith.constant 1.000000e+00 : f32
    %55 = vector.broadcast %cst_20 : f32 to vector<2x128xf32>
    %56 = arith.addf %55, %54 : vector<2x128xf32>
    %57 = arith.divf %55, %56 : vector<2x128xf32>
    %58 = math.tanh %52 : vector<2x128xf32>
    %59 = vector.extract_strided_slice %57 {offsets = [0, 0], sizes = [2, 32], strides = [1, 1]} : vector<2x128xf32> to vector<2x32xf32>
    %60 = vector.extract_strided_slice %57 {offsets = [0, 32], sizes = [2, 32], strides = [1, 1]} : vector<2x128xf32> to vector<2x32xf32>
    %61 = vector.extract_strided_slice %57 {offsets = [0, 96], sizes = [2, 32], strides = [1, 1]} : vector<2x128xf32> to vector<2x32xf32>
    %62 = vector.extract_strided_slice %58 {offsets = [0, 64], sizes = [2, 32], strides = [1, 1]} : vector<2x128xf32> to vector<2x32xf32>
    %63 = arith.mulf %60, %12 : vector<2x32xf32>
    %64 = arith.mulf %59, %62 : vector<2x32xf32>
    %65 = arith.addf %63, %64 : vector<2x32xf32>
    %66 = math.tanh %65 : vector<2x32xf32>
    %67 = arith.mulf %61, %66 : vector<2x32xf32>
    %68 = vector.extract_strided_slice %5 {offsets = [4, 0], sizes = [2, 128], strides = [1, 1]} : vector<16x128xf32> to vector<2x128xf32>
    %cst_21 = arith.constant dense<0.000000e+00> : vector<2x128xf32>
    %69 = tpu.matmul %48, %6, %cst_21 {dimension_numbers = #tpu.dot_dimension_numbers<[1], [0], [0], [1], [0, 0, 1, 1], [], []>} : vector<2x32xf32>, vector<32x128xf32>, vector<2x128xf32> -> vector<2x128xf32>
    %70 = arith.addf %68, %69 : vector<2x128xf32>
    %71 = arith.negf %70 : vector<2x128xf32>
    %72 = math.exp %71 : vector<2x128xf32>
    %cst_22 = arith.constant 1.000000e+00 : f32
    %73 = vector.broadcast %cst_22 : f32 to vector<2x128xf32>
    %74 = arith.addf %73, %72 : vector<2x128xf32>
    %75 = arith.divf %73, %74 : vector<2x128xf32>
    %76 = math.tanh %70 : vector<2x128xf32>
    %77 = vector.extract_strided_slice %75 {offsets = [0, 0], sizes = [2, 32], strides = [1, 1]} : vector<2x128xf32> to vector<2x32xf32>
    %78 = vector.extract_strided_slice %75 {offsets = [0, 32], sizes = [2, 32], strides = [1, 1]} : vector<2x128xf32> to vector<2x32xf32>
    %79 = vector.extract_strided_slice %75 {offsets = [0, 96], sizes = [2, 32], strides = [1, 1]} : vector<2x128xf32> to vector<2x32xf32>
    %80 = vector.extract_strided_slice %76 {offsets = [0, 64], sizes = [2, 32], strides = [1, 1]} : vector<2x128xf32> to vector<2x32xf32>
    %81 = arith.mulf %78, %46 : vector<2x32xf32>
    %82 = arith.mulf %77, %80 : vector<2x32xf32>
    %83 = arith.addf %81, %82 : vector<2x32xf32>
    %84 = math.tanh %83 : vector<2x32xf32>
    %85 = arith.mulf %79, %84 : vector<2x32xf32>
    %86 = tpu.concatenate %48, %67 in 1 : vector<2x32xf32>, vector<2x32xf32> -> vector<2x64xf32>
    %cst_23 = arith.constant dense<0.000000e+00> : vector<2x128xf32>
    %87 = tpu.matmul %86, %7, %cst_23 {dimension_numbers = #tpu.dot_dimension_numbers<[1], [0], [0], [1], [0, 0, 1, 1], [], []>} : vector<2x64xf32>, vector<64x128xf32>, vector<2x128xf32> -> vector<2x128xf32>
    %88 = vector.broadcast %8 : vector<1x128xf32> to vector<2x128xf32>
    %89 = arith.addf %87, %88 : vector<2x128xf32>
    %90 = arith.negf %89 : vector<2x128xf32>
    %91 = math.exp %90 : vector<2x128xf32>
    %cst_24 = arith.constant 1.000000e+00 : f32
    %92 = vector.broadcast %cst_24 : f32 to vector<2x128xf32>
    %93 = arith.addf %92, %91 : vector<2x128xf32>
    %94 = arith.divf %92, %93 : vector<2x128xf32>
    %95 = math.tanh %89 : vector<2x128xf32>
    %96 = vector.extract_strided_slice %94 {offsets = [0, 0], sizes = [2, 32], strides = [1, 1]} : vector<2x128xf32> to vector<2x32xf32>
    %97 = vector.extract_strided_slice %94 {offsets = [0, 32], sizes = [2, 32], strides = [1, 1]} : vector<2x128xf32> to vector<2x32xf32>
    %98 = vector.extract_strided_slice %94 {offsets = [0, 96], sizes = [2, 32], strides = [1, 1]} : vector<2x128xf32> to vector<2x32xf32>
    %99 = vector.extract_strided_slice %95 {offsets = [0, 64], sizes = [2, 32], strides = [1, 1]} : vector<2x128xf32> to vector<2x32xf32>
    %100 = arith.mulf %97, %65 : vector<2x32xf32>
    %101 = arith.mulf %96, %99 : vector<2x32xf32>
    %102 = arith.addf %100, %101 : vector<2x32xf32>
    %103 = math.tanh %102 : vector<2x32xf32>
    %104 = arith.mulf %98, %103 : vector<2x32xf32>
    %105 = vector.extract_strided_slice %5 {offsets = [6, 0], sizes = [2, 128], strides = [1, 1]} : vector<16x128xf32> to vector<2x128xf32>
    %cst_25 = arith.constant dense<0.000000e+00> : vector<2x128xf32>
    %106 = tpu.matmul %85, %6, %cst_25 {dimension_numbers = #tpu.dot_dimension_numbers<[1], [0], [0], [1], [0, 0, 1, 1], [], []>} : vector<2x32xf32>, vector<32x128xf32>, vector<2x128xf32> -> vector<2x128xf32>
    %107 = arith.addf %105, %106 : vector<2x128xf32>
    %108 = arith.negf %107 : vector<2x128xf32>
    %109 = math.exp %108 : vector<2x128xf32>
    %cst_26 = arith.constant 1.000000e+00 : f32
    %110 = vector.broadcast %cst_26 : f32 to vector<2x128xf32>
    %111 = arith.addf %110, %109 : vector<2x128xf32>
    %112 = arith.divf %110, %111 : vector<2x128xf32>
    %113 = math.tanh %107 : vector<2x128xf32>
    %114 = vector.extract_strided_slice %112 {offsets = [0, 0], sizes = [2, 32], strides = [1, 1]} : vector<2x128xf32> to vector<2x32xf32>
    %115 = vector.extract_strided_slice %112 {offsets = [0, 32], sizes = [2, 32], strides = [1, 1]} : vector<2x128xf32> to vector<2x32xf32>
    %116 = vector.extract_strided_slice %112 {offsets = [0, 96], sizes = [2, 32], strides = [1, 1]} : vector<2x128xf32> to vector<2x32xf32>
    %117 = vector.extract_strided_slice %113 {offsets = [0, 64], sizes = [2, 32], strides = [1, 1]} : vector<2x128xf32> to vector<2x32xf32>
    %118 = arith.mulf %115, %83 : vector<2x32xf32>
    %119 = arith.mulf %114, %117 : vector<2x32xf32>
    %120 = arith.addf %118, %119 : vector<2x32xf32>
    %121 = math.tanh %120 : vector<2x32xf32>
    %122 = arith.mulf %116, %121 : vector<2x32xf32>
    %123 = tpu.concatenate %85, %104 in 1 : vector<2x32xf32>, vector<2x32xf32> -> vector<2x64xf32>
    %cst_27 = arith.constant dense<0.000000e+00> : vector<2x128xf32>
    %124 = tpu.matmul %123, %7, %cst_27 {dimension_numbers = #tpu.dot_dimension_numbers<[1], [0], [0], [1], [0, 0, 1, 1], [], []>} : vector<2x64xf32>, vector<64x128xf32>, vector<2x128xf32> -> vector<2x128xf32>
    %125 = vector.broadcast %8 : vector<1x128xf32> to vector<2x128xf32>
    %126 = arith.addf %124, %125 : vector<2x128xf32>
    %127 = arith.negf %126 : vector<2x128xf32>
    %128 = math.exp %127 : vector<2x128xf32>
    %cst_28 = arith.constant 1.000000e+00 : f32
    %129 = vector.broadcast %cst_28 : f32 to vector<2x128xf32>
    %130 = arith.addf %129, %128 : vector<2x128xf32>
    %131 = arith.divf %129, %130 : vector<2x128xf32>
    %132 = math.tanh %126 : vector<2x128xf32>
    %133 = vector.extract_strided_slice %131 {offsets = [0, 0], sizes = [2, 32], strides = [1, 1]} : vector<2x128xf32> to vector<2x32xf32>
    %134 = vector.extract_strided_slice %131 {offsets = [0, 32], sizes = [2, 32], strides = [1, 1]} : vector<2x128xf32> to vector<2x32xf32>
    %135 = vector.extract_strided_slice %131 {offsets = [0, 96], sizes = [2, 32], strides = [1, 1]} : vector<2x128xf32> to vector<2x32xf32>
    %136 = vector.extract_strided_slice %132 {offsets = [0, 64], sizes = [2, 32], strides = [1, 1]} : vector<2x128xf32> to vector<2x32xf32>
    %137 = arith.mulf %134, %102 : vector<2x32xf32>
    %138 = arith.mulf %133, %136 : vector<2x32xf32>
    %139 = arith.addf %137, %138 : vector<2x32xf32>
    %140 = math.tanh %139 : vector<2x32xf32>
    %141 = arith.mulf %135, %140 : vector<2x32xf32>
    %142 = vector.extract_strided_slice %5 {offsets = [8, 0], sizes = [2, 128], strides = [1, 1]} : vector<16x128xf32> to vector<2x128xf32>
    %cst_29 = arith.constant dense<0.000000e+00> : vector<2x128xf32>
    %143 = tpu.matmul %122, %6, %cst_29 {dimension_numbers = #tpu.dot_dimension_numbers<[1], [0], [0], [1], [0, 0, 1, 1], [], []>} : vector<2x32xf32>, vector<32x128xf32>, vector<2x128xf32> -> vector<2x128xf32>
    %144 = arith.addf %142, %143 : vector<2x128xf32>
    %145 = arith.negf %144 : vector<2x128xf32>
    %146 = math.exp %145 : vector<2x128xf32>
    %cst_30 = arith.constant 1.000000e+00 : f32
    %147 = vector.broadcast %cst_30 : f32 to vector<2x128xf32>
    %148 = arith.addf %147, %146 : vector<2x128xf32>
    %149 = arith.divf %147, %148 : vector<2x128xf32>
    %150 = math.tanh %144 : vector<2x128xf32>
    %151 = vector.extract_strided_slice %149 {offsets = [0, 0], sizes = [2, 32], strides = [1, 1]} : vector<2x128xf32> to vector<2x32xf32>
    %152 = vector.extract_strided_slice %149 {offsets = [0, 32], sizes = [2, 32], strides = [1, 1]} : vector<2x128xf32> to vector<2x32xf32>
    %153 = vector.extract_strided_slice %149 {offsets = [0, 96], sizes = [2, 32], strides = [1, 1]} : vector<2x128xf32> to vector<2x32xf32>
    %154 = vector.extract_strided_slice %150 {offsets = [0, 64], sizes = [2, 32], strides = [1, 1]} : vector<2x128xf32> to vector<2x32xf32>
    %155 = arith.mulf %152, %120 : vector<2x32xf32>
    %156 = arith.mulf %151, %154 : vector<2x32xf32>
    %157 = arith.addf %155, %156 : vector<2x32xf32>
    %158 = math.tanh %157 : vector<2x32xf32>
    %159 = arith.mulf %153, %158 : vector<2x32xf32>
    %160 = tpu.concatenate %122, %141 in 1 : vector<2x32xf32>, vector<2x32xf32> -> vector<2x64xf32>
    %cst_31 = arith.constant dense<0.000000e+00> : vector<2x128xf32>
    %161 = tpu.matmul %160, %7, %cst_31 {dimension_numbers = #tpu.dot_dimension_numbers<[1], [0], [0], [1], [0, 0, 1, 1], [], []>} : vector<2x64xf32>, vector<64x128xf32>, vector<2x128xf32> -> vector<2x128xf32>
    %162 = vector.broadcast %8 : vector<1x128xf32> to vector<2x128xf32>
    %163 = arith.addf %161, %162 : vector<2x128xf32>
    %164 = arith.negf %163 : vector<2x128xf32>
    %165 = math.exp %164 : vector<2x128xf32>
    %cst_32 = arith.constant 1.000000e+00 : f32
    %166 = vector.broadcast %cst_32 : f32 to vector<2x128xf32>
    %167 = arith.addf %166, %165 : vector<2x128xf32>
    %168 = arith.divf %166, %167 : vector<2x128xf32>
    %169 = math.tanh %163 : vector<2x128xf32>
    %170 = vector.extract_strided_slice %168 {offsets = [0, 0], sizes = [2, 32], strides = [1, 1]} : vector<2x128xf32> to vector<2x32xf32>
    %171 = vector.extract_strided_slice %168 {offsets = [0, 32], sizes = [2, 32], strides = [1, 1]} : vector<2x128xf32> to vector<2x32xf32>
    %172 = vector.extract_strided_slice %168 {offsets = [0, 96], sizes = [2, 32], strides = [1, 1]} : vector<2x128xf32> to vector<2x32xf32>
    %173 = vector.extract_strided_slice %169 {offsets = [0, 64], sizes = [2, 32], strides = [1, 1]} : vector<2x128xf32> to vector<2x32xf32>
    %174 = arith.mulf %171, %139 : vector<2x32xf32>
    %175 = arith.mulf %170, %173 : vector<2x32xf32>
    %176 = arith.addf %174, %175 : vector<2x32xf32>
    %177 = math.tanh %176 : vector<2x32xf32>
    %178 = arith.mulf %172, %177 : vector<2x32xf32>
    %179 = vector.extract_strided_slice %5 {offsets = [10, 0], sizes = [2, 128], strides = [1, 1]} : vector<16x128xf32> to vector<2x128xf32>
    %cst_33 = arith.constant dense<0.000000e+00> : vector<2x128xf32>
    %180 = tpu.matmul %159, %6, %cst_33 {dimension_numbers = #tpu.dot_dimension_numbers<[1], [0], [0], [1], [0, 0, 1, 1], [], []>} : vector<2x32xf32>, vector<32x128xf32>, vector<2x128xf32> -> vector<2x128xf32>
    %181 = arith.addf %179, %180 : vector<2x128xf32>
    %182 = arith.negf %181 : vector<2x128xf32>
    %183 = math.exp %182 : vector<2x128xf32>
    %cst_34 = arith.constant 1.000000e+00 : f32
    %184 = vector.broadcast %cst_34 : f32 to vector<2x128xf32>
    %185 = arith.addf %184, %183 : vector<2x128xf32>
    %186 = arith.divf %184, %185 : vector<2x128xf32>
    %187 = math.tanh %181 : vector<2x128xf32>
    %188 = vector.extract_strided_slice %186 {offsets = [0, 0], sizes = [2, 32], strides = [1, 1]} : vector<2x128xf32> to vector<2x32xf32>
    %189 = vector.extract_strided_slice %186 {offsets = [0, 32], sizes = [2, 32], strides = [1, 1]} : vector<2x128xf32> to vector<2x32xf32>
    %190 = vector.extract_strided_slice %186 {offsets = [0, 96], sizes = [2, 32], strides = [1, 1]} : vector<2x128xf32> to vector<2x32xf32>
    %191 = vector.extract_strided_slice %187 {offsets = [0, 64], sizes = [2, 32], strides = [1, 1]} : vector<2x128xf32> to vector<2x32xf32>
    %192 = arith.mulf %189, %157 : vector<2x32xf32>
    %193 = arith.mulf %188, %191 : vector<2x32xf32>
    %194 = arith.addf %192, %193 : vector<2x32xf32>
    %195 = math.tanh %194 : vector<2x32xf32>
    %196 = arith.mulf %190, %195 : vector<2x32xf32>
    %197 = tpu.concatenate %159, %178 in 1 : vector<2x32xf32>, vector<2x32xf32> -> vector<2x64xf32>
    %cst_35 = arith.constant dense<0.000000e+00> : vector<2x128xf32>
    %198 = tpu.matmul %197, %7, %cst_35 {dimension_numbers = #tpu.dot_dimension_numbers<[1], [0], [0], [1], [0, 0, 1, 1], [], []>} : vector<2x64xf32>, vector<64x128xf32>, vector<2x128xf32> -> vector<2x128xf32>
    %199 = vector.broadcast %8 : vector<1x128xf32> to vector<2x128xf32>
    %200 = arith.addf %198, %199 : vector<2x128xf32>
    %201 = arith.negf %200 : vector<2x128xf32>
    %202 = math.exp %201 : vector<2x128xf32>
    %cst_36 = arith.constant 1.000000e+00 : f32
    %203 = vector.broadcast %cst_36 : f32 to vector<2x128xf32>
    %204 = arith.addf %203, %202 : vector<2x128xf32>
    %205 = arith.divf %203, %204 : vector<2x128xf32>
    %206 = math.tanh %200 : vector<2x128xf32>
    %207 = vector.extract_strided_slice %205 {offsets = [0, 0], sizes = [2, 32], strides = [1, 1]} : vector<2x128xf32> to vector<2x32xf32>
    %208 = vector.extract_strided_slice %205 {offsets = [0, 32], sizes = [2, 32], strides = [1, 1]} : vector<2x128xf32> to vector<2x32xf32>
    %209 = vector.extract_strided_slice %205 {offsets = [0, 96], sizes = [2, 32], strides = [1, 1]} : vector<2x128xf32> to vector<2x32xf32>
    %210 = vector.extract_strided_slice %206 {offsets = [0, 64], sizes = [2, 32], strides = [1, 1]} : vector<2x128xf32> to vector<2x32xf32>
    %211 = arith.mulf %208, %176 : vector<2x32xf32>
    %212 = arith.mulf %207, %210 : vector<2x32xf32>
    %213 = arith.addf %211, %212 : vector<2x32xf32>
    %214 = math.tanh %213 : vector<2x32xf32>
    %215 = arith.mulf %209, %214 : vector<2x32xf32>
    %216 = vector.extract_strided_slice %5 {offsets = [12, 0], sizes = [2, 128], strides = [1, 1]} : vector<16x128xf32> to vector<2x128xf32>
    %cst_37 = arith.constant dense<0.000000e+00> : vector<2x128xf32>
    %217 = tpu.matmul %196, %6, %cst_37 {dimension_numbers = #tpu.dot_dimension_numbers<[1], [0], [0], [1], [0, 0, 1, 1], [], []>} : vector<2x32xf32>, vector<32x128xf32>, vector<2x128xf32> -> vector<2x128xf32>
    %218 = arith.addf %216, %217 : vector<2x128xf32>
    %219 = arith.negf %218 : vector<2x128xf32>
    %220 = math.exp %219 : vector<2x128xf32>
    %cst_38 = arith.constant 1.000000e+00 : f32
    %221 = vector.broadcast %cst_38 : f32 to vector<2x128xf32>
    %222 = arith.addf %221, %220 : vector<2x128xf32>
    %223 = arith.divf %221, %222 : vector<2x128xf32>
    %224 = math.tanh %218 : vector<2x128xf32>
    %225 = vector.extract_strided_slice %223 {offsets = [0, 0], sizes = [2, 32], strides = [1, 1]} : vector<2x128xf32> to vector<2x32xf32>
    %226 = vector.extract_strided_slice %223 {offsets = [0, 32], sizes = [2, 32], strides = [1, 1]} : vector<2x128xf32> to vector<2x32xf32>
    %227 = vector.extract_strided_slice %223 {offsets = [0, 96], sizes = [2, 32], strides = [1, 1]} : vector<2x128xf32> to vector<2x32xf32>
    %228 = vector.extract_strided_slice %224 {offsets = [0, 64], sizes = [2, 32], strides = [1, 1]} : vector<2x128xf32> to vector<2x32xf32>
    %229 = arith.mulf %226, %194 : vector<2x32xf32>
    %230 = arith.mulf %225, %228 : vector<2x32xf32>
    %231 = arith.addf %229, %230 : vector<2x32xf32>
    %232 = math.tanh %231 : vector<2x32xf32>
    %233 = arith.mulf %227, %232 : vector<2x32xf32>
    %234 = tpu.concatenate %196, %215 in 1 : vector<2x32xf32>, vector<2x32xf32> -> vector<2x64xf32>
    %cst_39 = arith.constant dense<0.000000e+00> : vector<2x128xf32>
    %235 = tpu.matmul %234, %7, %cst_39 {dimension_numbers = #tpu.dot_dimension_numbers<[1], [0], [0], [1], [0, 0, 1, 1], [], []>} : vector<2x64xf32>, vector<64x128xf32>, vector<2x128xf32> -> vector<2x128xf32>
    %236 = vector.broadcast %8 : vector<1x128xf32> to vector<2x128xf32>
    %237 = arith.addf %235, %236 : vector<2x128xf32>
    %238 = arith.negf %237 : vector<2x128xf32>
    %239 = math.exp %238 : vector<2x128xf32>
    %cst_40 = arith.constant 1.000000e+00 : f32
    %240 = vector.broadcast %cst_40 : f32 to vector<2x128xf32>
    %241 = arith.addf %240, %239 : vector<2x128xf32>
    %242 = arith.divf %240, %241 : vector<2x128xf32>
    %243 = math.tanh %237 : vector<2x128xf32>
    %244 = vector.extract_strided_slice %242 {offsets = [0, 0], sizes = [2, 32], strides = [1, 1]} : vector<2x128xf32> to vector<2x32xf32>
    %245 = vector.extract_strided_slice %242 {offsets = [0, 32], sizes = [2, 32], strides = [1, 1]} : vector<2x128xf32> to vector<2x32xf32>
    %246 = vector.extract_strided_slice %242 {offsets = [0, 96], sizes = [2, 32], strides = [1, 1]} : vector<2x128xf32> to vector<2x32xf32>
    %247 = vector.extract_strided_slice %243 {offsets = [0, 64], sizes = [2, 32], strides = [1, 1]} : vector<2x128xf32> to vector<2x32xf32>
    %248 = arith.mulf %245, %213 : vector<2x32xf32>
    %249 = arith.mulf %244, %247 : vector<2x32xf32>
    %250 = arith.addf %248, %249 : vector<2x32xf32>
    %251 = math.tanh %250 : vector<2x32xf32>
    %252 = arith.mulf %246, %251 : vector<2x32xf32>
    %253 = vector.extract_strided_slice %5 {offsets = [14, 0], sizes = [2, 128], strides = [1, 1]} : vector<16x128xf32> to vector<2x128xf32>
    %cst_41 = arith.constant dense<0.000000e+00> : vector<2x128xf32>
    %254 = tpu.matmul %233, %6, %cst_41 {dimension_numbers = #tpu.dot_dimension_numbers<[1], [0], [0], [1], [0, 0, 1, 1], [], []>} : vector<2x32xf32>, vector<32x128xf32>, vector<2x128xf32> -> vector<2x128xf32>
    %255 = arith.addf %253, %254 : vector<2x128xf32>
    %256 = arith.negf %255 : vector<2x128xf32>
    %257 = math.exp %256 : vector<2x128xf32>
    %cst_42 = arith.constant 1.000000e+00 : f32
    %258 = vector.broadcast %cst_42 : f32 to vector<2x128xf32>
    %259 = arith.addf %258, %257 : vector<2x128xf32>
    %260 = arith.divf %258, %259 : vector<2x128xf32>
    %261 = math.tanh %255 : vector<2x128xf32>
    %262 = vector.extract_strided_slice %260 {offsets = [0, 0], sizes = [2, 32], strides = [1, 1]} : vector<2x128xf32> to vector<2x32xf32>
    %263 = vector.extract_strided_slice %260 {offsets = [0, 32], sizes = [2, 32], strides = [1, 1]} : vector<2x128xf32> to vector<2x32xf32>
    %264 = vector.extract_strided_slice %260 {offsets = [0, 96], sizes = [2, 32], strides = [1, 1]} : vector<2x128xf32> to vector<2x32xf32>
    %265 = vector.extract_strided_slice %261 {offsets = [0, 64], sizes = [2, 32], strides = [1, 1]} : vector<2x128xf32> to vector<2x32xf32>
    %266 = arith.mulf %263, %231 : vector<2x32xf32>
    %267 = arith.mulf %262, %265 : vector<2x32xf32>
    %268 = arith.addf %266, %267 : vector<2x32xf32>
    %269 = math.tanh %268 : vector<2x32xf32>
    %270 = arith.mulf %264, %269 : vector<2x32xf32>
    %271 = tpu.concatenate %233, %252 in 1 : vector<2x32xf32>, vector<2x32xf32> -> vector<2x64xf32>
    %cst_43 = arith.constant dense<0.000000e+00> : vector<2x128xf32>
    %272 = tpu.matmul %271, %7, %cst_43 {dimension_numbers = #tpu.dot_dimension_numbers<[1], [0], [0], [1], [0, 0, 1, 1], [], []>} : vector<2x64xf32>, vector<64x128xf32>, vector<2x128xf32> -> vector<2x128xf32>
    %273 = vector.broadcast %8 : vector<1x128xf32> to vector<2x128xf32>
    %274 = arith.addf %272, %273 : vector<2x128xf32>
    %275 = arith.negf %274 : vector<2x128xf32>
    %276 = math.exp %275 : vector<2x128xf32>
    %cst_44 = arith.constant 1.000000e+00 : f32
    %277 = vector.broadcast %cst_44 : f32 to vector<2x128xf32>
    %278 = arith.addf %277, %276 : vector<2x128xf32>
    %279 = arith.divf %277, %278 : vector<2x128xf32>
    %280 = math.tanh %274 : vector<2x128xf32>
    %281 = vector.extract_strided_slice %279 {offsets = [0, 0], sizes = [2, 32], strides = [1, 1]} : vector<2x128xf32> to vector<2x32xf32>
    %282 = vector.extract_strided_slice %279 {offsets = [0, 32], sizes = [2, 32], strides = [1, 1]} : vector<2x128xf32> to vector<2x32xf32>
    %283 = vector.extract_strided_slice %279 {offsets = [0, 96], sizes = [2, 32], strides = [1, 1]} : vector<2x128xf32> to vector<2x32xf32>
    %284 = vector.extract_strided_slice %280 {offsets = [0, 64], sizes = [2, 32], strides = [1, 1]} : vector<2x128xf32> to vector<2x32xf32>
    %285 = arith.mulf %282, %250 : vector<2x32xf32>
    %286 = arith.mulf %281, %284 : vector<2x32xf32>
    %287 = arith.addf %285, %286 : vector<2x32xf32>
    %288 = math.tanh %287 : vector<2x32xf32>
    %289 = arith.mulf %283, %288 : vector<2x32xf32>
    %290 = tpu.concatenate %270, %289 in 1 : vector<2x32xf32>, vector<2x32xf32> -> vector<2x64xf32>
    %cst_45 = arith.constant dense<0.000000e+00> : vector<2x128xf32>
    %291 = tpu.matmul %290, %7, %cst_45 {dimension_numbers = #tpu.dot_dimension_numbers<[1], [0], [0], [1], [0, 0, 1, 1], [], []>} : vector<2x64xf32>, vector<64x128xf32>, vector<2x128xf32> -> vector<2x128xf32>
    %292 = vector.broadcast %8 : vector<1x128xf32> to vector<2x128xf32>
    %293 = arith.addf %291, %292 : vector<2x128xf32>
    %294 = arith.negf %293 : vector<2x128xf32>
    %295 = math.exp %294 : vector<2x128xf32>
    %cst_46 = arith.constant 1.000000e+00 : f32
    %296 = vector.broadcast %cst_46 : f32 to vector<2x128xf32>
    %297 = arith.addf %296, %295 : vector<2x128xf32>
    %298 = arith.divf %296, %297 : vector<2x128xf32>
    %299 = math.tanh %293 : vector<2x128xf32>
    %300 = vector.extract_strided_slice %298 {offsets = [0, 0], sizes = [2, 32], strides = [1, 1]} : vector<2x128xf32> to vector<2x32xf32>
    %301 = vector.extract_strided_slice %298 {offsets = [0, 32], sizes = [2, 32], strides = [1, 1]} : vector<2x128xf32> to vector<2x32xf32>
    %302 = vector.extract_strided_slice %298 {offsets = [0, 96], sizes = [2, 32], strides = [1, 1]} : vector<2x128xf32> to vector<2x32xf32>
    %303 = vector.extract_strided_slice %299 {offsets = [0, 64], sizes = [2, 32], strides = [1, 1]} : vector<2x128xf32> to vector<2x32xf32>
    %304 = arith.mulf %301, %287 : vector<2x32xf32>
    %305 = arith.mulf %300, %303 : vector<2x32xf32>
    %306 = arith.addf %304, %305 : vector<2x32xf32>
    %307 = math.tanh %306 : vector<2x32xf32>
    %308 = arith.mulf %302, %307 : vector<2x32xf32>
    %309 = tpu.concatenate %67, %104, %141, %178, %215, %252, %289, %308 in 0 : vector<2x32xf32>, vector<2x32xf32>, vector<2x32xf32>, vector<2x32xf32>, vector<2x32xf32>, vector<2x32xf32>, vector<2x32xf32>, vector<2x32xf32> -> vector<16x32xf32>
    %c0_47 = arith.constant 0 : index
    %c0_48 = arith.constant 0 : index
    %310 = vector.load %arg6[%c0_47, %c0_48] : memref<16x32xf32, #tpu.memory_space<vmem>>, vector<16x32xf32>
    tpu.vector_store %arg6[%c0_47, %c0_48], %309 {strides = array<i32>} : memref<16x32xf32, #tpu.memory_space<vmem>>, vector<16x32xf32>,
    %311 = tpu.concatenate %270, %308, %268, %306 in 0 : vector<2x32xf32>, vector<2x32xf32>, vector<2x32xf32>, vector<2x32xf32> -> vector<8x32xf32>
    %c0_49 = arith.constant 0 : index
    %c0_50 = arith.constant 0 : index
    %312 = vector.load %arg7[%c0_49, %c0_50] : memref<8x32xf32, #tpu.memory_space<vmem>>, vector<8x32xf32>
    tpu.vector_store %arg7[%c0_49, %c0_50], %311 {strides = array<i32>} : memref<8x32xf32, #tpu.memory_space<vmem>>, vector<8x32xf32>,
    return
  }
}

</mosaic_0001>

<llo_original>
// kernel: lstm_model_forward.1
$region0: #{lstm_model_forward.1}
  #allocation0 [shape = 'u32[]', space=smem, size = 0x4, offset = 0x4, fixed_abs, tag = 'smem constant byte address 0x4 - core index']
  #allocation1 [shape = 'u32[144,128]{1,0:T(1,128)}', space=vmem, size = 0x12000, scoped, tag = 'internal scratch']
  %s0 = inlined_call_operand.vmem [shape: f32[16,16], index: 0, kind: input, shape index: {}]
  %s1 = inlined_call_operand.vmem [shape: f32[16,128], index: 1, kind: input, shape index: {}]
  %s2 = inlined_call_operand.vmem [shape: f32[32,128], index: 2, kind: input, shape index: {}]
  %s3 = inlined_call_operand.vmem [shape: f32[1,128], index: 3, kind: input, shape index: {}]
  %s4 = inlined_call_operand.vmem [shape: f32[64,128], index: 4, kind: input, shape index: {}]
  %s5 = inlined_call_operand.vmem [shape: f32[1,128], index: 5, kind: input, shape index: {}]
  %s6 = inlined_call_operand.hbm [shape: f32[16,32], index: 6, kind: output, shape index: {0}]
  %s7 = inlined_call_operand.vmem [shape: f32[8,32], index: 7, kind: output, shape index: {1}]
  %8 = xla_tuple %s6, %s7
  %s9 = sld [smem:[#allocation0]]
  $region42: #{lstm_model_forward.1} parent=0
    _
  %s11 = ssub.s32 1, %s9
  %s12 = scalar_select 0, %s11, %s9
  $region1: #{lstm_model_forward.1} parent=0
    #allocation2 [shape = 'u8[8192]{0}', space=vmem, size = 0x2000, scoped, tag = 'output window, operand 0, single buffered']
    #allocation3 [shape = 's32[1]{0}', space=sflag, size = 0x4, scoped, tag = 'scoped memory for lstm_model_forward.1']
    %13 = vsyncpa [#allocation3], 0
    // Predicated region
    $region2: #{lstm_model_forward.1} parent=1 // pred_check
      _
    $region3: #{lstm_model_forward.1} parent=1 // pred_check_branch
      %15 = sbr.rel (0) target = $region5
    $region4: #{lstm_model_forward.1} parent=1 // pred_region
      _
    $region5: #{lstm_model_forward.1} parent=1 // pred_fallthru
      _
    // Predicated region
    $region6: #{lstm_model_forward.1} parent=1 // pred_check
      _
    $region7: #{lstm_model_forward.1} parent=1 // pred_check_branch
      %17 = sbr.rel (0) target = $region9
    $region8: #{lstm_model_forward.1} parent=1 // pred_region
      _
    $region9: #{lstm_model_forward.1} parent=1 // pred_fallthru
      _
    // Predicated region
    $region10: #{lstm_model_forward.1} parent=1 // pred_check
      _
    $region11: #{lstm_model_forward.1} parent=1 // pred_check_branch
      %19 = sbr.rel (0) target = $region13
    $region12: #{lstm_model_forward.1} parent=1 // pred_region
      _
    $region13: #{lstm_model_forward.1} parent=1 // pred_fallthru
      _
    // Predicated region
    $region14: #{lstm_model_forward.1} parent=1 // pred_check
      _
    $region15: #{lstm_model_forward.1} parent=1 // pred_check_branch
      %21 = sbr.rel (0) target = $region17
    $region16: #{lstm_model_forward.1} parent=1 // pred_region
      _
    $region17: #{lstm_model_forward.1} parent=1 // pred_fallthru
      _
    // Predicated region
    $region18: #{lstm_model_forward.1} parent=1 // pred_check
      _
    $region19: #{lstm_model_forward.1} parent=1 // pred_check_branch
      %23 = sbr.rel (0) target = $region21
    $region20: #{lstm_model_forward.1} parent=1 // pred_region
      _
    $region21: #{lstm_model_forward.1} parent=1 // pred_fallthru
      _
    // Predicated region
    $region22: #{lstm_model_forward.1} parent=1 // pred_check
      _
    $region23: #{lstm_model_forward.1} parent=1 // pred_check_branch
      %25 = sbr.rel (0) target = $region25
    $region24: #{lstm_model_forward.1} parent=1 // pred_region
      _
    $region25: #{lstm_model_forward.1} parent=1 // pred_fallthru
      _
    %v26 = vld [vmem:[%s0] sm:$0xff]
    %v27 = vld [vmem:[%s0 + $0x8] sm:$0xff]
    %v28 = vld [vmem:[%s1] sm:$0xff]
    %v29 = vld [vmem:[%s1 + $0x8] sm:$0xff]
    %v30 = vld [vmem:[%s3] sm:$0x1]
    %v32 = vlaneseq
    %v33 = vshrl.u32 %v32, 7
    %v34 = vsub.s32 0, %v33
    %v35 = vrot.slane %v30, %v34
    %vm37 = vcmask 130048
    %v39 = vsel %vm37, %v26, 0
    %v42 = vsel %vm37, %v27, 0
    %44 = vmatprep.subr.mxu0 0.0
    %45 = vmatpush1.msra.mxu0 %v28
    %46 = vmatprep.subr.mxu0 0.0
    %47 = vmatpush1.msra.mxu0 %v29
    %48 = vmatprep.subr.mxu0 0.0
    %49 = vmatpush1.msra.mxu0 0.0
    %50 = vmatprep.subr.mxu0 0.0
    %51 = vmatpush1.msra.mxu0 0.0
    %52 = vmatprep.subr.mxu0 0.0
    %53 = vmatpush1.msra.mxu0 0.0
    %54 = vmatprep.subr.mxu0 0.0
    %55 = vmatpush1.msra.mxu0 0.0
    %56 = vmatprep.subr.mxu0 0.0
    %57 = vmatpush1.msra.mxu0 0.0
    %58 = vmatprep.subr.mxu0 0.0
    %59 = vmatpush1.msra.mxu0 0.0
    %60 = vmatprep.subr.mxu0 0.0
    %61 = vmatpush1.msra.mxu0 0.0
    %62 = vmatprep.subr.mxu0 0.0
    %63 = vmatpush1.msra.mxu0 0.0
    %64 = vmatprep.subr.mxu0 0.0
    %65 = vmatpush1.msra.mxu0 0.0
    %66 = vmatprep.subr.mxu0 0.0
    %67 = vmatpush1.msra.mxu0 0.0
    %68 = vmatprep.subr.mxu0 0.0
    %69 = vmatpush1.msra.mxu0 0.0
    %70 = vmatprep.subr.mxu0 0.0
    %71 = vmatpush1.msra.mxu0 0.0
    %72 = vmatprep.subr.mxu0 0.0
    %73 = vmatpush1.msra.mxu0 0.0
    %74 = vmatprep.subr.mxu0 0.0
    %75 = vmatpush1.msra.mxu0 0.0
    %76 = vmatprep.subr.mxu0 0.0
    %77 = vmatpush1.msra.mxu0 0.0
    %78 = vmatprep.subr.mxu0 0.0
    %79 = vmatpush1.msra.mxu0 0.0
    %80 = vmatprep.subr.mxu0 0.0
    %81 = vmatpush1.msra.mxu0 0.0
    %82 = vmatprep.subr.mxu0 0.0
    %83 = vmatpush1.msra.mxu0 0.0
    %84 = vmatprep.subr.mxu0 0.0
    %85 = vmatpush1.msra.mxu0 0.0
    %86 = vmatprep.subr.mxu0 0.0
    %87 = vmatpush1.msra.mxu0 0.0
    %88 = vmatprep.subr.mxu0 0.0
    %89 = vmatpush1.msra.mxu0 0.0
    %90 = vmatprep.subr.mxu0 0.0
    %91 = vmatpush1.msra.mxu0 0.0
    %92 = vmatprep.subr.mxu0 0.0
    %93 = vmatpush1.msra.mxu0 0.0
    %94 = vmatprep.subr.mxu0 0.0
    %95 = vmatpush1.msra.mxu0 0.0
    %96 = vmatprep.subr.mxu0 0.0
    %97 = vmatpush1.msra.mxu0 0.0
    %98 = vmatprep.subr.mxu0 0.0
    %99 = vmatpush1.msra.mxu0 0.0
    %100 = vmatprep.subr.mxu0 0.0
    %101 = vmatpush1.msra.mxu0 0.0
    %102 = vmatprep.subr.mxu0 0.0
    %103 = vmatpush1.msra.mxu0 0.0
    %104 = vmatprep.subr.mxu0 0.0
    %105 = vmatpush1.msra.mxu0 0.0
    %106 = vmatprep.subr.mxu0 0.0
    %107 = vmatpush1.msra.mxu0 0.0
    %108 = vmatprep.mubr.f32.mxu0 0.0
    %109 = vmatmul.mubr.f32.gmra.mrb[0].mxu0 %v39
    %v110 = vpop.f32.mrb[0].mxu0
    %v111 = vadd.f32 %v35, %v110
    %v112 = vpop.f32.mrb[0].mxu0
    %113 = vmatprep.mubr.f32.mxu0 0.0
    %114 = vmatmul.mubr.f32.gmra.mrb[0].mxu0 %v42
    %v115 = vpop.f32.mrb[0].mxu0
    %v116 = vadd.f32 %v35, %v115
    %v117 = vpop.f32.mrb[0].mxu0
    %118 = vdwg.mxu0
    %v119 = vld [vmem:[%s2] sm:$0xff]
    %v120 = vld [vmem:[%s2 + $0x8] sm:$0xff]
    %v121 = vld [vmem:[%s2 + $0x10] sm:$0xff]
    %v122 = vld [vmem:[%s2 + $0x18] sm:$0xff]
    %v123 = vld [vmem:[%s4] sm:$0xff]
    %v124 = vld [vmem:[%s4 + $0x8] sm:$0xff]
    %v125 = vld [vmem:[%s4 + $0x10] sm:$0xff]
    %v126 = vld [vmem:[%s4 + $0x18] sm:$0xff]
    %v127 = vld [vmem:[%s4 + $0x20] sm:$0xff]
    %v128 = vld [vmem:[%s4 + $0x28] sm:$0xff]
    %v129 = vld [vmem:[%s4 + $0x30] sm:$0xff]
    %v130 = vld [vmem:[%s4 + $0x38] sm:$0xff]
    %v131 = vld [vmem:[%s5] sm:$0x1]
    %vm132 = vcmask 261120
    %v134 = vsel %vm132, 0.0, 0
    %136 = vmatprep.subr.mxu0 0.0
    %137 = vmatpush1.msra.mxu0 %v119
    %138 = vmatprep.subr.mxu0 0.0
    %139 = vmatpush1.msra.mxu0 %v120
    %140 = vmatprep.subr.mxu0 0.0
    %141 = vmatpush1.msra.mxu0 %v121
    %142 = vmatprep.subr.mxu0 0.0
    %143 = vmatpush1.msra.mxu0 %v122
    %144 = vmatprep.subr.mxu0 0.0
    %145 = vmatpush1.msra.mxu0 0.0
    %146 = vmatprep.subr.mxu0 0.0
    %147 = vmatpush1.msra.mxu0 0.0
    %148 = vmatprep.subr.mxu0 0.0
    %149 = vmatpush1.msra.mxu0 0.0
    %150 = vmatprep.subr.mxu0 0.0
    %151 = vmatpush1.msra.mxu0 0.0
    %152 = vmatprep.subr.mxu0 0.0
    %153 = vmatpush1.msra.mxu0 0.0
    %154 = vmatprep.subr.mxu0 0.0
    %155 = vmatpush1.msra.mxu0 0.0
    %156 = vmatprep.subr.mxu0 0.0
    %157 = vmatpush1.msra.mxu0 0.0
    %158 = vmatprep.subr.mxu0 0.0
    %159 = vmatpush1.msra.mxu0 0.0
    %160 = vmatprep.subr.mxu0 0.0
    %161 = vmatpush1.msra.mxu0 0.0
    %162 = vmatprep.subr.mxu0 0.0
    %163 = vmatpush1.msra.mxu0 0.0
    %164 = vmatprep.subr.mxu0 0.0
    %165 = vmatpush1.msra.mxu0 0.0
    %166 = vmatprep.subr.mxu0 0.0
    %167 = vmatpush1.msra.mxu0 0.0
    %168 = vmatprep.subr.mxu0 0.0
    %169 = vmatpush1.msra.mxu0 0.0
    %170 = vmatprep.subr.mxu0 0.0
    %171 = vmatpush1.msra.mxu0 0.0
    %172 = vmatprep.subr.mxu0 0.0
    %173 = vmatpush1.msra.mxu0 0.0
    %174 = vmatprep.subr.mxu0 0.0
    %175 = vmatpush1.msra.mxu0 0.0
    %176 = vmatprep.subr.mxu0 0.0
    %177 = vmatpush1.msra.mxu0 0.0
    %178 = vmatprep.subr.mxu0 0.0
    %179 = vmatpush1.msra.mxu0 0.0
    %180 = vmatprep.subr.mxu0 0.0
    %181 = vmatpush1.msra.mxu0 0.0
    %182 = vmatprep.subr.mxu0 0.0
    %183 = vmatpush1.msra.mxu0 0.0
    %184 = vmatprep.subr.mxu0 0.0
    %185 = vmatpush1.msra.mxu0 0.0
    %186 = vmatprep.subr.mxu0 0.0
    %187 = vmatpush1.msra.mxu0 0.0
    %188 = vmatprep.subr.mxu0 0.0
    %189 = vmatpush1.msra.mxu0 0.0
    %190 = vmatprep.subr.mxu0 0.0
    %191 = vmatpush1.msra.mxu0 0.0
    %192 = vmatprep.subr.mxu0 0.0
    %193 = vmatpush1.msra.mxu0 0.0
    %194 = vmatprep.subr.mxu0 0.0
    %195 = vmatpush1.msra.mxu0 0.0
    %196 = vmatprep.subr.mxu0 0.0
    %197 = vmatpush1.msra.mxu0 0.0
    %198 = vmatprep.subr.mxu0 0.0
    %199 = vmatpush1.msra.mxu0 0.0
    %200 = vmatprep.mubr.f32.mxu0 0.0
    %201 = vmatmul.mubr.f32.gmra.mrb[0].mxu0 %v134
    %v202 = vpop.f32.mrb[0].mxu0
    %v203 = vadd.f32 0.0, %v202
    %v204 = vpop.f32.mrb[0].mxu0
    %205 = vdwg.mxu0
    %v206 = vadd.f32 %v111, %v203
    %v207 = vxor.u32 %v206, 2147483648
    %v208 = vmul.f32 %v207, 1.442695
    %v209 = vpow.pop %v208
    %v210 = vadd.f32 %v209, 1.0
    %v211 = vrcp.pop %v210
    %v212 = vmul.f32 1.0, %v211
    %v213 = vtanh.pop %v206
    %v214 = vmul.f32 %v212, 0.0
    %216 = vrot.lane.b32.xlu0 %v213, 64
    %v217 = vpop.permute.xlu0 %216
    %v219 = vmul.f32 %v212, %v217
    %221 = vrot.lane.b32.xlu0 %v219, 32
    %v222 = vpop.permute.xlu0 %221
    %v224 = vadd.f32 %v214, %v222
    %v225 = vtanh.pop %v224
    %227 = vrot.lane.b32.xlu0 %v225, 64
    %v228 = vpop.permute.xlu0 %227
    %v230 = vmul.f32 %v212, %v228
    %232 = vrot.lane.b32.xlu0 %v230, 32
    %v233 = vpop.permute.xlu0 %232
    %v234 = vsel %vm132, %v233, 0
    %236 = vmatprep.subr.mxu0 0.0
    %237 = vmatpush1.msra.mxu0 %v119
    %238 = vmatprep.subr.mxu0 0.0
    %239 = vmatpush1.msra.mxu0 %v120
    %240 = vmatprep.subr.mxu0 0.0
    %241 = vmatpush1.msra.mxu0 %v121
    %242 = vmatprep.subr.mxu0 0.0
    %243 = vmatpush1.msra.mxu0 %v122
    %244 = vmatprep.subr.mxu0 0.0
    %245 = vmatpush1.msra.mxu0 0.0
    %246 = vmatprep.subr.mxu0 0.0
    %247 = vmatpush1.msra.mxu0 0.0
    %248 = vmatprep.subr.mxu0 0.0
    %249 = vmatpush1.msra.mxu0 0.0
    %250 = vmatprep.subr.mxu0 0.0
    %251 = vmatpush1.msra.mxu0 0.0
    %252 = vmatprep.subr.mxu0 0.0
    %253 = vmatpush1.msra.mxu0 0.0
    %254 = vmatprep.subr.mxu0 0.0
    %255 = vmatpush1.msra.mxu0 0.0
    %256 = vmatprep.subr.mxu0 0.0
    %257 = vmatpush1.msra.mxu0 0.0
    %258 = vmatprep.subr.mxu0 0.0
    %259 = vmatpush1.msra.mxu0 0.0
    %260 = vmatprep.subr.mxu0 0.0
    %261 = vmatpush1.msra.mxu0 0.0
    %262 = vmatprep.subr.mxu0 0.0
    %263 = vmatpush1.msra.mxu0 0.0
    %264 = vmatprep.subr.mxu0 0.0
    %265 = vmatpush1.msra.mxu0 0.0
    %266 = vmatprep.subr.mxu0 0.0
    %267 = vmatpush1.msra.mxu0 0.0
    %268 = vmatprep.subr.mxu0 0.0
    %269 = vmatpush1.msra.mxu0 0.0
    %270 = vmatprep.subr.mxu0 0.0
    %271 = vmatpush1.msra.mxu0 0.0
    %272 = vmatprep.subr.mxu0 0.0
    %273 = vmatpush1.msra.mxu0 0.0
    %274 = vmatprep.subr.mxu0 0.0
    %275 = vmatpush1.msra.mxu0 0.0
    %276 = vmatprep.subr.mxu0 0.0
    %277 = vmatpush1.msra.mxu0 0.0
    %278 = vmatprep.subr.mxu0 0.0
    %279 = vmatpush1.msra.mxu0 0.0
    %280 = vmatprep.subr.mxu0 0.0
    %281 = vmatpush1.msra.mxu0 0.0
    %282 = vmatprep.subr.mxu0 0.0
    %283 = vmatpush1.msra.mxu0 0.0
    %284 = vmatprep.subr.mxu0 0.0
    %285 = vmatpush1.msra.mxu0 0.0
    %286 = vmatprep.subr.mxu0 0.0
    %287 = vmatpush1.msra.mxu0 0.0
    %288 = vmatprep.subr.mxu0 0.0
    %289 = vmatpush1.msra.mxu0 0.0
    %290 = vmatprep.subr.mxu0 0.0
    %291 = vmatpush1.msra.mxu0 0.0
    %292 = vmatprep.subr.mxu0 0.0
    %293 = vmatpush1.msra.mxu0 0.0
    %294 = vmatprep.subr.mxu0 0.0
    %295 = vmatpush1.msra.mxu0 0.0
    %296 = vmatprep.subr.mxu0 0.0
    %297 = vmatpush1.msra.mxu0 0.0
    %298 = vmatprep.subr.mxu0 0.0
    %299 = vmatpush1.msra.mxu0 0.0
    %300 = vmatprep.mubr.f32.mxu0 0.0
    %301 = vmatmul.mubr.f32.gmra.mrb[0].mxu0 %v234
    %v302 = vpop.f32.mrb[0].mxu0
    %v303 = vadd.f32 0.0, %v302
    %v304 = vpop.f32.mrb[0].mxu0
    %305 = vdwg.mxu0
    %v307 = vrot.slane %v303, 6
    %v309 = vadd.f32 %v111, %v307
    %v310 = vxor.u32 %v309, 2147483648
    %v311 = vmul.f32 %v310, 1.442695
    %v312 = vpow.pop %v311
    %v313 = vadd.f32 %v312, 1.0
    %v314 = vrcp.pop %v313
    %v315 = vmul.f32 1.0, %v314
    %v316 = vtanh.pop %v309
    %v318 = vrot.slane %v224, 6
    %v320 = vmul.f32 %v315, %v318
    %322 = vrot.lane.b32.xlu0 %v316, 64
    %v323 = vpop.permute.xlu0 %322
    %v325 = vmul.f32 %v315, %v323
    %327 = vrot.lane.b32.xlu0 %v325, 32
    %v328 = vpop.permute.xlu0 %327
    %v330 = vadd.f32 %v320, %v328
    %v331 = vtanh.pop %v330
    %333 = vrot.lane.b32.xlu0 %v331, 64
    %v334 = vpop.permute.xlu0 %333
    %v336 = vmul.f32 %v315, %v334
    %v338 = vsel %vm132, %v233, 0.0
    %v340 = vlaneseq
    %v341 = vshrl.u32 %v340, 7
    %v342 = vsub.s32 0, %v341
    %v343 = vrot.slane %v131, %v342
    %vm345 = vcmask 523264
    %v347 = vsel %vm345, %v338, 0
    %349 = vmatprep.subr.mxu0 0.0
    %350 = vmatpush1.msra.mxu0 %v123
    %351 = vmatprep.subr.mxu0 0.0
    %352 = vmatpush1.msra.mxu0 %v124
    %353 = vmatprep.subr.mxu0 0.0
    %354 = vmatpush1.msra.mxu0 %v125
    %355 = vmatprep.subr.mxu0 0.0
    %356 = vmatpush1.msra.mxu0 %v126
    %357 = vmatprep.subr.mxu0 0.0
    %358 = vmatpush1.msra.mxu0 %v127
    %359 = vmatprep.subr.mxu0 0.0
    %360 = vmatpush1.msra.mxu0 %v128
    %361 = vmatprep.subr.mxu0 0.0
    %362 = vmatpush1.msra.mxu0 %v129
    %363 = vmatprep.subr.mxu0 0.0
    %364 = vmatpush1.msra.mxu0 %v130
    %365 = vmatprep.subr.mxu0 0.0
    %366 = vmatpush1.msra.mxu0 0.0
    %367 = vmatprep.subr.mxu0 0.0
    %368 = vmatpush1.msra.mxu0 0.0
    %369 = vmatprep.subr.mxu0 0.0
    %370 = vmatpush1.msra.mxu0 0.0
    %371 = vmatprep.subr.mxu0 0.0
    %372 = vmatpush1.msra.mxu0 0.0
    %373 = vmatprep.subr.mxu0 0.0
    %374 = vmatpush1.msra.mxu0 0.0
    %375 = vmatprep.subr.mxu0 0.0
    %376 = vmatpush1.msra.mxu0 0.0
    %377 = vmatprep.subr.mxu0 0.0
    %378 = vmatpush1.msra.mxu0 0.0
    %379 = vmatprep.subr.mxu0 0.0
    %380 = vmatpush1.msra.mxu0 0.0
    %381 = vmatprep.subr.mxu0 0.0
    %382 = vmatpush1.msra.mxu0 0.0
    %383 = vmatprep.subr.mxu0 0.0
    %384 = vmatpush1.msra.mxu0 0.0
    %385 = vmatprep.subr.mxu0 0.0
    %386 = vmatpush1.msra.mxu0 0.0
    %387 = vmatprep.subr.mxu0 0.0
    %388 = vmatpush1.msra.mxu0 0.0
    %389 = vmatprep.subr.mxu0 0.0
    %390 = vmatpush1.msra.mxu0 0.0
    %391 = vmatprep.subr.mxu0 0.0
    %392 = vmatpush1.msra.mxu0 0.0
    %393 = vmatprep.subr.mxu0 0.0
    %394 = vmatpush1.msra.mxu0 0.0
    %395 = vmatprep.subr.mxu0 0.0
    %396 = vmatpush1.msra.mxu0 0.0
    %397 = vmatprep.subr.mxu0 0.0
    %398 = vmatpush1.msra.mxu0 0.0
    %399 = vmatprep.subr.mxu0 0.0
    %400 = vmatpush1.msra.mxu0 0.0
    %401 = vmatprep.subr.mxu0 0.0
    %402 = vmatpush1.msra.mxu0 0.0
    %403 = vmatprep.subr.mxu0 0.0
    %404 = vmatpush1.msra.mxu0 0.0
    %405 = vmatprep.subr.mxu0 0.0
    %406 = vmatpush1.msra.mxu0 0.0
    %407 = vmatprep.subr.mxu0 0.0
    %408 = vmatpush1.msra.mxu0 0.0
    %409 = vmatprep.subr.mxu0 0.0
    %410 = vmatpush1.msra.mxu0 0.0
    %411 = vmatprep.subr.mxu0 0.0
    %412 = vmatpush1.msra.mxu0 0.0
    %413 = vmatprep.mubr.f32.mxu0 0.0
    %414 = vmatmul.mubr.f32.gmra.mrb[0].mxu0 %v347
    %v415 = vpop.f32.mrb[0].mxu0
    %v416 = vadd.f32 %v343, %v415
    %v417 = vpop.f32.mrb[0].mxu0
    %418 = vdwg.mxu0
    %v419 = vxor.u32 %v416, 2147483648
    %v420 = vmul.f32 %v419, 1.442695
    %v421 = vpow.pop %v420
    %v422 = vadd.f32 %v421, 1.0
    %v423 = vrcp.pop %v422
    %v424 = vmul.f32 1.0, %v423
    %v425 = vtanh.pop %v416
    %v426 = vmul.f32 %v424, 0.0
    %428 = vrot.lane.b32.xlu0 %v425, 64
    %v429 = vpop.permute.xlu0 %428
    %v431 = vmul.f32 %v424, %v429
    %433 = vrot.lane.b32.xlu0 %v431, 32
    %v434 = vpop.permute.xlu0 %433
    %v436 = vadd.f32 %v426, %v434
    %v437 = vtanh.pop %v436
    %439 = vrot.lane.b32.xlu0 %v437, 64
    %v440 = vpop.permute.xlu0 %439
    %v442 = vmul.f32 %v424, %v440
    %v444 = vrot.slane %v336, 2
    %445 = vrot.lane.b32.xlu0 %v444, 32
    %v446 = vpop.permute.xlu0 %445
    %v447 = vsel %vm132, %v446, 0
    %449 = vmatprep.subr.mxu0 0.0
    %450 = vmatpush1.msra.mxu0 %v119
    %451 = vmatprep.subr.mxu0 0.0
    %452 = vmatpush1.msra.mxu0 %v120
    %453 = vmatprep.subr.mxu0 0.0
    %454 = vmatpush1.msra.mxu0 %v121
    %455 = vmatprep.subr.mxu0 0.0
    %456 = vmatpush1.msra.mxu0 %v122
    %457 = vmatprep.subr.mxu0 0.0
    %458 = vmatpush1.msra.mxu0 0.0
    %459 = vmatprep.subr.mxu0 0.0
    %460 = vmatpush1.msra.mxu0 0.0
    %461 = vmatprep.subr.mxu0 0.0
    %462 = vmatpush1.msra.mxu0 0.0
    %463 = vmatprep.subr.mxu0 0.0
    %464 = vmatpush1.msra.mxu0 0.0
    %465 = vmatprep.subr.mxu0 0.0
    %466 = vmatpush1.msra.mxu0 0.0
    %467 = vmatprep.subr.mxu0 0.0
    %468 = vmatpush1.msra.mxu0 0.0
    %469 = vmatprep.subr.mxu0 0.0
    %470 = vmatpush1.msra.mxu0 0.0
    %471 = vmatprep.subr.mxu0 0.0
    %472 = vmatpush1.msra.mxu0 0.0
    %473 = vmatprep.subr.mxu0 0.0
    %474 = vmatpush1.msra.mxu0 0.0
    %475 = vmatprep.subr.mxu0 0.0
    %476 = vmatpush1.msra.mxu0 0.0
    %477 = vmatprep.subr.mxu0 0.0
    %478 = vmatpush1.msra.mxu0 0.0
    %479 = vmatprep.subr.mxu0 0.0
    %480 = vmatpush1.msra.mxu0 0.0
    %481 = vmatprep.subr.mxu0 0.0
    %482 = vmatpush1.msra.mxu0 0.0
    %483 = vmatprep.subr.mxu0 0.0
    %484 = vmatpush1.msra.mxu0 0.0
    %485 = vmatprep.subr.mxu0 0.0
    %486 = vmatpush1.msra.mxu0 0.0
    %487 = vmatprep.subr.mxu0 0.0
    %488 = vmatpush1.msra.mxu0 0.0
    %489 = vmatprep.subr.mxu0 0.0
    %490 = vmatpush1.msra.mxu0 0.0
    %491 = vmatprep.subr.mxu0 0.0
    %492 = vmatpush1.msra.mxu0 0.0
    %493 = vmatprep.subr.mxu0 0.0
    %494 = vmatpush1.msra.mxu0 0.0
    %495 = vmatprep.subr.mxu0 0.0
    %496 = vmatpush1.msra.mxu0 0.0
    %497 = vmatprep.subr.mxu0 0.0
    %498 = vmatpush1.msra.mxu0 0.0
    %499 = vmatprep.subr.mxu0 0.0
    %500 = vmatpush1.msra.mxu0 0.0
    %501 = vmatprep.subr.mxu0 0.0
    %502 = vmatpush1.msra.mxu0 0.0
    %503 = vmatprep.subr.mxu0 0.0
    %504 = vmatpush1.msra.mxu0 0.0
    %505 = vmatprep.subr.mxu0 0.0
    %506 = vmatpush1.msra.mxu0 0.0
    %507 = vmatprep.subr.mxu0 0.0
    %508 = vmatpush1.msra.mxu0 0.0
    %509 = vmatprep.subr.mxu0 0.0
    %510 = vmatpush1.msra.mxu0 0.0
    %511 = vmatprep.subr.mxu0 0.0
    %512 = vmatpush1.msra.mxu0 0.0
    %513 = vmatprep.mubr.f32.mxu0 0.0
    %514 = vmatmul.mubr.f32.gmra.mrb[0].mxu0 %v447
    %v515 = vpop.f32.mrb[0].mxu0
    %v516 = vadd.f32 0.0, %v515
    %v517 = vpop.f32.mrb[0].mxu0
    %518 = vdwg.mxu0
    %v520 = vrot.slane %v516, 4
    %v522 = vadd.f32 %v111, %v520
    %v523 = vxor.u32 %v522, 2147483648
    %v524 = vmul.f32 %v523, 1.442695
    %v525 = vpow.pop %v524
    %v526 = vadd.f32 %v525, 1.0
    %v527 = vrcp.pop %v526
    %v528 = vmul.f32 1.0, %v527
    %v529 = vtanh.pop %v522
    %v531 = vrot.slane %v330, 6
    %v533 = vmul.f32 %v528, %v531
    %535 = vrot.lane.b32.xlu0 %v529, 64
    %v536 = vpop.permute.xlu0 %535
    %v538 = vmul.f32 %v528, %v536
    %540 = vrot.lane.b32.xlu0 %v538, 32
    %v541 = vpop.permute.xlu0 %540
    %v543 = vadd.f32 %v533, %v541
    %v544 = vtanh.pop %v543
    %546 = vrot.lane.b32.xlu0 %v544, 64
    %v547 = vpop.permute.xlu0 %546
    %v549 = vmul.f32 %v528, %v547
    %550 = vrot.lane.b32.xlu0 %v336, 32
    %v551 = vpop.permute.xlu0 %550
    %v554 = vrot.slane %v442, 6
    %555 = vrot.lane.b32.xlu0 %v554, 64
    %v556 = vpop.permute.xlu0 %555
    %v558 = vsel %vm132, %v551, %v556
    %v560 = vrot.slane %v558, 2
    %v561 = vsel %vm345, %v560, 0
    %563 = vmatprep.subr.mxu0 0.0
    %564 = vmatpush1.msra.mxu0 %v123
    %565 = vmatprep.subr.mxu0 0.0
    %566 = vmatpush1.msra.mxu0 %v124
    %567 = vmatprep.subr.mxu0 0.0
    %568 = vmatpush1.msra.mxu0 %v125
    %569 = vmatprep.subr.mxu0 0.0
    %570 = vmatpush1.msra.mxu0 %v126
    %571 = vmatprep.subr.mxu0 0.0
    %572 = vmatpush1.msra.mxu0 %v127
    %573 = vmatprep.subr.mxu0 0.0
    %574 = vmatpush1.msra.mxu0 %v128
    %575 = vmatprep.subr.mxu0 0.0
    %576 = vmatpush1.msra.mxu0 %v129
    %577 = vmatprep.subr.mxu0 0.0
    %578 = vmatpush1.msra.mxu0 %v130
    %579 = vmatprep.subr.mxu0 0.0
    %580 = vmatpush1.msra.mxu0 0.0
    %581 = vmatprep.subr.mxu0 0.0
    %582 = vmatpush1.msra.mxu0 0.0
    %583 = vmatprep.subr.mxu0 0.0
    %584 = vmatpush1.msra.mxu0 0.0
    %585 = vmatprep.subr.mxu0 0.0
    %586 = vmatpush1.msra.mxu0 0.0
    %587 = vmatprep.subr.mxu0 0.0
    %588 = vmatpush1.msra.mxu0 0.0
    %589 = vmatprep.subr.mxu0 0.0
    %590 = vmatpush1.msra.mxu0 0.0
    %591 = vmatprep.subr.mxu0 0.0
    %592 = vmatpush1.msra.mxu0 0.0
    %593 = vmatprep.subr.mxu0 0.0
    %594 = vmatpush1.msra.mxu0 0.0
    %595 = vmatprep.subr.mxu0 0.0
    %596 = vmatpush1.msra.mxu0 0.0
    %597 = vmatprep.subr.mxu0 0.0
    %598 = vmatpush1.msra.mxu0 0.0
    %599 = vmatprep.subr.mxu0 0.0
    %600 = vmatpush1.msra.mxu0 0.0
    %601 = vmatprep.subr.mxu0 0.0
    %602 = vmatpush1.msra.mxu0 0.0
    %603 = vmatprep.subr.mxu0 0.0
    %604 = vmatpush1.msra.mxu0 0.0
    %605 = vmatprep.subr.mxu0 0.0
    %606 = vmatpush1.msra.mxu0 0.0
    %607 = vmatprep.subr.mxu0 0.0
    %608 = vmatpush1.msra.mxu0 0.0
    %609 = vmatprep.subr.mxu0 0.0
    %610 = vmatpush1.msra.mxu0 0.0
    %611 = vmatprep.subr.mxu0 0.0
    %612 = vmatpush1.msra.mxu0 0.0
    %613 = vmatprep.subr.mxu0 0.0
    %614 = vmatpush1.msra.mxu0 0.0
    %615 = vmatprep.subr.mxu0 0.0
    %616 = vmatpush1.msra.mxu0 0.0
    %617 = vmatprep.subr.mxu0 0.0
    %618 = vmatpush1.msra.mxu0 0.0
    %619 = vmatprep.subr.mxu0 0.0
    %620 = vmatpush1.msra.mxu0 0.0
    %621 = vmatprep.subr.mxu0 0.0
    %622 = vmatpush1.msra.mxu0 0.0
    %623 = vmatprep.subr.mxu0 0.0
    %624 = vmatpush1.msra.mxu0 0.0
    %625 = vmatprep.subr.mxu0 0.0
    %626 = vmatpush1.msra.mxu0 0.0
    %627 = vmatprep.mubr.f32.mxu0 0.0
    %628 = vmatmul.mubr.f32.gmra.mrb[0].mxu0 %v561
    %v629 = vpop.f32.mrb[0].mxu0
    %v630 = vadd.f32 %v343, %v629
    %v631 = vpop.f32.mrb[0].mxu0
    %632 = vdwg.mxu0
    %v633 = vxor.u32 %v630, 2147483648
    %v634 = vmul.f32 %v633, 1.442695
    %v635 = vpow.pop %v634
    %v636 = vadd.f32 %v635, 1.0
    %v637 = vrcp.pop %v636
    %v638 = vmul.f32 1.0, %v637
    %v639 = vtanh.pop %v630
    %v640 = vmul.f32 %v638, %v436
    %642 = vrot.lane.b32.xlu0 %v639, 64
    %v643 = vpop.permute.xlu0 %642
    %v645 = vmul.f32 %v638, %v643
    %647 = vrot.lane.b32.xlu0 %v645, 32
    %v648 = vpop.permute.xlu0 %647
    %v650 = vadd.f32 %v640, %v648
    %v651 = vtanh.pop %v650
    %653 = vrot.lane.b32.xlu0 %v651, 64
    %v654 = vpop.permute.xlu0 %653
    %v656 = vmul.f32 %v638, %v654
    %v658 = vrot.slane %v549, 4
    %659 = vrot.lane.b32.xlu0 %v658, 32
    %v660 = vpop.permute.xlu0 %659
    %v661 = vsel %vm132, %v660, 0
    %663 = vmatprep.subr.mxu0 0.0
    %664 = vmatpush1.msra.mxu0 %v119
    %665 = vmatprep.subr.mxu0 0.0
    %666 = vmatpush1.msra.mxu0 %v120
    %667 = vmatprep.subr.mxu0 0.0
    %668 = vmatpush1.msra.mxu0 %v121
    %669 = vmatprep.subr.mxu0 0.0
    %670 = vmatpush1.msra.mxu0 %v122
    %671 = vmatprep.subr.mxu0 0.0
    %672 = vmatpush1.msra.mxu0 0.0
    %673 = vmatprep.subr.mxu0 0.0
    %674 = vmatpush1.msra.mxu0 0.0
    %675 = vmatprep.subr.mxu0 0.0
    %676 = vmatpush1.msra.mxu0 0.0
    %677 = vmatprep.subr.mxu0 0.0
    %678 = vmatpush1.msra.mxu0 0.0
    %679 = vmatprep.subr.mxu0 0.0
    %680 = vmatpush1.msra.mxu0 0.0
    %681 = vmatprep.subr.mxu0 0.0
    %682 = vmatpush1.msra.mxu0 0.0
    %683 = vmatprep.subr.mxu0 0.0
    %684 = vmatpush1.msra.mxu0 0.0
    %685 = vmatprep.subr.mxu0 0.0
    %686 = vmatpush1.msra.mxu0 0.0
    %687 = vmatprep.subr.mxu0 0.0
    %688 = vmatpush1.msra.mxu0 0.0
    %689 = vmatprep.subr.mxu0 0.0
    %690 = vmatpush1.msra.mxu0 0.0
    %691 = vmatprep.subr.mxu0 0.0
    %692 = vmatpush1.msra.mxu0 0.0
    %693 = vmatprep.subr.mxu0 0.0
    %694 = vmatpush1.msra.mxu0 0.0
    %695 = vmatprep.subr.mxu0 0.0
    %696 = vmatpush1.msra.mxu0 0.0
    %697 = vmatprep.subr.mxu0 0.0
    %698 = vmatpush1.msra.mxu0 0.0
    %699 = vmatprep.subr.mxu0 0.0
    %700 = vmatpush1.msra.mxu0 0.0
    %701 = vmatprep.subr.mxu0 0.0
    %702 = vmatpush1.msra.mxu0 0.0
    %703 = vmatprep.subr.mxu0 0.0
    %704 = vmatpush1.msra.mxu0 0.0
    %705 = vmatprep.subr.mxu0 0.0
    %706 = vmatpush1.msra.mxu0 0.0
    %707 = vmatprep.subr.mxu0 0.0
    %708 = vmatpush1.msra.mxu0 0.0
    %709 = vmatprep.subr.mxu0 0.0
    %710 = vmatpush1.msra.mxu0 0.0
    %711 = vmatprep.subr.mxu0 0.0
    %712 = vmatpush1.msra.mxu0 0.0
    %713 = vmatprep.subr.mxu0 0.0
    %714 = vmatpush1.msra.mxu0 0.0
    %715 = vmatprep.subr.mxu0 0.0
    %716 = vmatpush1.msra.mxu0 0.0
    %717 = vmatprep.subr.mxu0 0.0
    %718 = vmatpush1.msra.mxu0 0.0
    %719 = vmatprep.subr.mxu0 0.0
    %720 = vmatpush1.msra.mxu0 0.0
    %721 = vmatprep.subr.mxu0 0.0
    %722 = vmatpush1.msra.mxu0 0.0
    %723 = vmatprep.subr.mxu0 0.0
    %724 = vmatpush1.msra.mxu0 0.0
    %725 = vmatprep.subr.mxu0 0.0
    %726 = vmatpush1.msra.mxu0 0.0
    %727 = vmatprep.mubr.f32.mxu0 0.0
    %728 = vmatmul.mubr.f32.gmra.mrb[0].mxu0 %v661
    %v729 = vpop.f32.mrb[0].mxu0
    %v730 = vadd.f32 0.0, %v729
    %v731 = vpop.f32.mrb[0].mxu0
    %732 = vdwg.mxu0
    %v734 = vrot.slane %v730, 2
    %v736 = vadd.f32 %v111, %v734
    %v737 = vxor.u32 %v736, 2147483648
    %v738 = vmul.f32 %v737, 1.442695
    %v739 = vpow.pop %v738
    %v740 = vadd.f32 %v739, 1.0
    %v741 = vrcp.pop %v740
    %v742 = vmul.f32 1.0, %v741
    %v743 = vtanh.pop %v736
    %v745 = vrot.slane %v543, 6
    %v747 = vmul.f32 %v742, %v745
    %749 = vrot.lane.b32.xlu0 %v743, 64
    %v750 = vpop.permute.xlu0 %749
    %v752 = vmul.f32 %v742, %v750
    %754 = vrot.lane.b32.xlu0 %v752, 32
    %v755 = vpop.permute.xlu0 %754
    %v757 = vadd.f32 %v747, %v755
    %v758 = vtanh.pop %v757
    %760 = vrot.lane.b32.xlu0 %v758, 64
    %v761 = vpop.permute.xlu0 %760
    %v763 = vmul.f32 %v742, %v761
    %764 = vrot.lane.b32.xlu0 %v549, 32
    %v765 = vpop.permute.xlu0 %764
    %v768 = vrot.slane %v656, 4
    %769 = vrot.lane.b32.xlu0 %v768, 64
    %v770 = vpop.permute.xlu0 %769
    %v772 = vsel %vm132, %v765, %v770
    %v774 = vrot.slane %v772, 4
    %v775 = vsel %vm345, %v774, 0
    %777 = vmatprep.subr.mxu0 0.0
    %778 = vmatpush1.msra.mxu0 %v123
    %779 = vmatprep.subr.mxu0 0.0
    %780 = vmatpush1.msra.mxu0 %v124
    %781 = vmatprep.subr.mxu0 0.0
    %782 = vmatpush1.msra.mxu0 %v125
    %783 = vmatprep.subr.mxu0 0.0
    %784 = vmatpush1.msra.mxu0 %v126
    %785 = vmatprep.subr.mxu0 0.0
    %786 = vmatpush1.msra.mxu0 %v127
    %787 = vmatprep.subr.mxu0 0.0
    %788 = vmatpush1.msra.mxu0 %v128
    %789 = vmatprep.subr.mxu0 0.0
    %790 = vmatpush1.msra.mxu0 %v129
    %791 = vmatprep.subr.mxu0 0.0
    %792 = vmatpush1.msra.mxu0 %v130
    %793 = vmatprep.subr.mxu0 0.0
    %794 = vmatpush1.msra.mxu0 0.0
    %795 = vmatprep.subr.mxu0 0.0
    %796 = vmatpush1.msra.mxu0 0.0
    %797 = vmatprep.subr.mxu0 0.0
    %798 = vmatpush1.msra.mxu0 0.0
    %799 = vmatprep.subr.mxu0 0.0
    %800 = vmatpush1.msra.mxu0 0.0
    %801 = vmatprep.subr.mxu0 0.0
    %802 = vmatpush1.msra.mxu0 0.0
    %803 = vmatprep.subr.mxu0 0.0
    %804 = vmatpush1.msra.mxu0 0.0
    %805 = vmatprep.subr.mxu0 0.0
    %806 = vmatpush1.msra.mxu0 0.0
    %807 = vmatprep.subr.mxu0 0.0
    %808 = vmatpush1.msra.mxu0 0.0
    %809 = vmatprep.subr.mxu0 0.0
    %810 = vmatpush1.msra.mxu0 0.0
    %811 = vmatprep.subr.mxu0 0.0
    %812 = vmatpush1.msra.mxu0 0.0
    %813 = vmatprep.subr.mxu0 0.0
    %814 = vmatpush1.msra.mxu0 0.0
    %815 = vmatprep.subr.mxu0 0.0
    %816 = vmatpush1.msra.mxu0 0.0
    %817 = vmatprep.subr.mxu0 0.0
    %818 = vmatpush1.msra.mxu0 0.0
    %819 = vmatprep.subr.mxu0 0.0
    %820 = vmatpush1.msra.mxu0 0.0
    %821 = vmatprep.subr.mxu0 0.0
    %822 = vmatpush1.msra.mxu0 0.0
    %823 = vmatprep.subr.mxu0 0.0
    %824 = vmatpush1.msra.mxu0 0.0
    %825 = vmatprep.subr.mxu0 0.0
    %826 = vmatpush1.msra.mxu0 0.0
    %827 = vmatprep.subr.mxu0 0.0
    %828 = vmatpush1.msra.mxu0 0.0
    %829 = vmatprep.subr.mxu0 0.0
    %830 = vmatpush1.msra.mxu0 0.0
    %831 = vmatprep.subr.mxu0 0.0
    %832 = vmatpush1.msra.mxu0 0.0
    %833 = vmatprep.subr.mxu0 0.0
    %834 = vmatpush1.msra.mxu0 0.0
    %835 = vmatprep.subr.mxu0 0.0
    %836 = vmatpush1.msra.mxu0 0.0
    %837 = vmatprep.subr.mxu0 0.0
    %838 = vmatpush1.msra.mxu0 0.0
    %839 = vmatprep.subr.mxu0 0.0
    %840 = vmatpush1.msra.mxu0 0.0
    %841 = vmatprep.mubr.f32.mxu0 0.0
    %842 = vmatmul.mubr.f32.gmra.mrb[0].mxu0 %v775
    %v843 = vpop.f32.mrb[0].mxu0
    %v844 = vadd.f32 %v343, %v843
    %v845 = vpop.f32.mrb[0].mxu0
    %846 = vdwg.mxu0
    %v847 = vxor.u32 %v844, 2147483648
    %v848 = vmul.f32 %v847, 1.442695
    %v849 = vpow.pop %v848
    %v850 = vadd.f32 %v849, 1.0
    %v851 = vrcp.pop %v850
    %v852 = vmul.f32 1.0, %v851
    %v853 = vtanh.pop %v844
    %v854 = vmul.f32 %v852, %v650
    %856 = vrot.lane.b32.xlu0 %v853, 64
    %v857 = vpop.permute.xlu0 %856
    %v859 = vmul.f32 %v852, %v857
    %861 = vrot.lane.b32.xlu0 %v859, 32
    %v862 = vpop.permute.xlu0 %861
    %v864 = vadd.f32 %v854, %v862
    %v865 = vtanh.pop %v864
    %867 = vrot.lane.b32.xlu0 %v865, 64
    %v868 = vpop.permute.xlu0 %867
    %v870 = vmul.f32 %v852, %v868
    %v872 = vrot.slane %v763, 6
    %873 = vrot.lane.b32.xlu0 %v872, 32
    %v874 = vpop.permute.xlu0 %873
    %v875 = vsel %vm132, %v874, 0
    %877 = vmatprep.subr.mxu0 0.0
    %878 = vmatpush1.msra.mxu0 %v119
    %879 = vmatprep.subr.mxu0 0.0
    %880 = vmatpush1.msra.mxu0 %v120
    %881 = vmatprep.subr.mxu0 0.0
    %882 = vmatpush1.msra.mxu0 %v121
    %883 = vmatprep.subr.mxu0 0.0
    %884 = vmatpush1.msra.mxu0 %v122
    %885 = vmatprep.subr.mxu0 0.0
    %886 = vmatpush1.msra.mxu0 0.0
    %887 = vmatprep.subr.mxu0 0.0
    %888 = vmatpush1.msra.mxu0 0.0
    %889 = vmatprep.subr.mxu0 0.0
    %890 = vmatpush1.msra.mxu0 0.0
    %891 = vmatprep.subr.mxu0 0.0
    %892 = vmatpush1.msra.mxu0 0.0
    %893 = vmatprep.subr.mxu0 0.0
    %894 = vmatpush1.msra.mxu0 0.0
    %895 = vmatprep.subr.mxu0 0.0
    %896 = vmatpush1.msra.mxu0 0.0
    %897 = vmatprep.subr.mxu0 0.0
    %898 = vmatpush1.msra.mxu0 0.0
    %899 = vmatprep.subr.mxu0 0.0
    %900 = vmatpush1.msra.mxu0 0.0
    %901 = vmatprep.subr.mxu0 0.0
    %902 = vmatpush1.msra.mxu0 0.0
    %903 = vmatprep.subr.mxu0 0.0
    %904 = vmatpush1.msra.mxu0 0.0
    %905 = vmatprep.subr.mxu0 0.0
    %906 = vmatpush1.msra.mxu0 0.0
    %907 = vmatprep.subr.mxu0 0.0
    %908 = vmatpush1.msra.mxu0 0.0
    %909 = vmatprep.subr.mxu0 0.0
    %910 = vmatpush1.msra.mxu0 0.0
    %911 = vmatprep.subr.mxu0 0.0
    %912 = vmatpush1.msra.mxu0 0.0
    %913 = vmatprep.subr.mxu0 0.0
    %914 = vmatpush1.msra.mxu0 0.0
    %915 = vmatprep.subr.mxu0 0.0
    %916 = vmatpush1.msra.mxu0 0.0
    %917 = vmatprep.subr.mxu0 0.0
    %918 = vmatpush1.msra.mxu0 0.0
    %919 = vmatprep.subr.mxu0 0.0
    %920 = vmatpush1.msra.mxu0 0.0
    %921 = vmatprep.subr.mxu0 0.0
    %922 = vmatpush1.msra.mxu0 0.0
    %923 = vmatprep.subr.mxu0 0.0
    %924 = vmatpush1.msra.mxu0 0.0
    %925 = vmatprep.subr.mxu0 0.0
    %926 = vmatpush1.msra.mxu0 0.0
    %927 = vmatprep.subr.mxu0 0.0
    %928 = vmatpush1.msra.mxu0 0.0
    %929 = vmatprep.subr.mxu0 0.0
    %930 = vmatpush1.msra.mxu0 0.0
    %931 = vmatprep.subr.mxu0 0.0
    %932 = vmatpush1.msra.mxu0 0.0
    %933 = vmatprep.subr.mxu0 0.0
    %934 = vmatpush1.msra.mxu0 0.0
    %935 = vmatprep.subr.mxu0 0.0
    %936 = vmatpush1.msra.mxu0 0.0
    %937 = vmatprep.subr.mxu0 0.0
    %938 = vmatpush1.msra.mxu0 0.0
    %939 = vmatprep.subr.mxu0 0.0
    %940 = vmatpush1.msra.mxu0 0.0
    %941 = vmatprep.mubr.f32.mxu0 0.0
    %942 = vmatmul.mubr.f32.gmra.mrb[0].mxu0 %v875
    %v943 = vpop.f32.mrb[0].mxu0
    %v944 = vadd.f32 0.0, %v943
    %v945 = vpop.f32.mrb[0].mxu0
    %946 = vdwg.mxu0
    %v947 = vadd.f32 %v116, %v944
    %v948 = vxor.u32 %v947, 2147483648
    %v949 = vmul.f32 %v948, 1.442695
    %v950 = vpow.pop %v949
    %v951 = vadd.f32 %v950, 1.0
    %v952 = vrcp.pop %v951
    %v953 = vmul.f32 1.0, %v952
    %v954 = vtanh.pop %v947
    %v956 = vrot.slane %v757, 6
    %v958 = vmul.f32 %v953, %v956
    %960 = vrot.lane.b32.xlu0 %v954, 64
    %v961 = vpop.permute.xlu0 %960
    %v963 = vmul.f32 %v953, %v961
    %965 = vrot.lane.b32.xlu0 %v963, 32
    %v966 = vpop.permute.xlu0 %965
    %v968 = vadd.f32 %v958, %v966
    %v969 = vtanh.pop %v968
    %971 = vrot.lane.b32.xlu0 %v969, 64
    %v972 = vpop.permute.xlu0 %971
    %v974 = vmul.f32 %v953, %v972
    %975 = vrot.lane.b32.xlu0 %v763, 32
    %v976 = vpop.permute.xlu0 %975
    %v979 = vrot.slane %v870, 2
    %980 = vrot.lane.b32.xlu0 %v979, 64
    %v981 = vpop.permute.xlu0 %980
    %v983 = vsel %vm132, %v976, %v981
    %v985 = vrot.slane %v983, 6
    %v986 = vsel %vm345, %v985, 0
    %988 = vmatprep.subr.mxu0 0.0
    %989 = vmatpush1.msra.mxu0 %v123
    %990 = vmatprep.subr.mxu0 0.0
    %991 = vmatpush1.msra.mxu0 %v124
    %992 = vmatprep.subr.mxu0 0.0
    %993 = vmatpush1.msra.mxu0 %v125
    %994 = vmatprep.subr.mxu0 0.0
    %995 = vmatpush1.msra.mxu0 %v126
    %996 = vmatprep.subr.mxu0 0.0
    %997 = vmatpush1.msra.mxu0 %v127
    %998 = vmatprep.subr.mxu0 0.0
    %999 = vmatpush1.msra.mxu0 %v128
    %1000 = vmatprep.subr.mxu0 0.0
    %1001 = vmatpush1.msra.mxu0 %v129
    %1002 = vmatprep.subr.mxu0 0.0
    %1003 = vmatpush1.msra.mxu0 %v130
    %1004 = vmatprep.subr.mxu0 0.0
    %1005 = vmatpush1.msra.mxu0 0.0
    %1006 = vmatprep.subr.mxu0 0.0
    %1007 = vmatpush1.msra.mxu0 0.0
    %1008 = vmatprep.subr.mxu0 0.0
    %1009 = vmatpush1.msra.mxu0 0.0
    %1010 = vmatprep.subr.mxu0 0.0
    %1011 = vmatpush1.msra.mxu0 0.0
    %1012 = vmatprep.subr.mxu0 0.0
    %1013 = vmatpush1.msra.mxu0 0.0
    %1014 = vmatprep.subr.mxu0 0.0
    %1015 = vmatpush1.msra.mxu0 0.0
    %1016 = vmatprep.subr.mxu0 0.0
    %1017 = vmatpush1.msra.mxu0 0.0
    %1018 = vmatprep.subr.mxu0 0.0
    %1019 = vmatpush1.msra.mxu0 0.0
    %1020 = vmatprep.subr.mxu0 0.0
    %1021 = vmatpush1.msra.mxu0 0.0
    %1022 = vmatprep.subr.mxu0 0.0
    %1023 = vmatpush1.msra.mxu0 0.0
    %1024 = vmatprep.subr.mxu0 0.0
    %1025 = vmatpush1.msra.mxu0 0.0
    %1026 = vmatprep.subr.mxu0 0.0
    %1027 = vmatpush1.msra.mxu0 0.0
    %1028 = vmatprep.subr.mxu0 0.0
    %1029 = vmatpush1.msra.mxu0 0.0
    %1030 = vmatprep.subr.mxu0 0.0
    %1031 = vmatpush1.msra.mxu0 0.0
    %1032 = vmatprep.subr.mxu0 0.0
    %1033 = vmatpush1.msra.mxu0 0.0
    %1034 = vmatprep.subr.mxu0 0.0
    %1035 = vmatpush1.msra.mxu0 0.0
    %1036 = vmatprep.subr.mxu0 0.0
    %1037 = vmatpush1.msra.mxu0 0.0
    %1038 = vmatprep.subr.mxu0 0.0
    %1039 = vmatpush1.msra.mxu0 0.0
    %1040 = vmatprep.subr.mxu0 0.0
    %1041 = vmatpush1.msra.mxu0 0.0
    %1042 = vmatprep.subr.mxu0 0.0
    %1043 = vmatpush1.msra.mxu0 0.0
    %1044 = vmatprep.subr.mxu0 0.0
    %1045 = vmatpush1.msra.mxu0 0.0
    %1046 = vmatprep.subr.mxu0 0.0
    %1047 = vmatpush1.msra.mxu0 0.0
    %1048 = vmatprep.subr.mxu0 0.0
    %1049 = vmatpush1.msra.mxu0 0.0
    %1050 = vmatprep.subr.mxu0 0.0
    %1051 = vmatpush1.msra.mxu0 0.0
    %1052 = vmatprep.mubr.f32.mxu0 0.0
    %1053 = vmatmul.mubr.f32.gmra.mrb[0].mxu0 %v986
    %v1054 = vpop.f32.mrb[0].mxu0
    %v1055 = vadd.f32 %v343, %v1054
    %v1056 = vpop.f32.mrb[0].mxu0
    %1057 = vdwg.mxu0
    %v1058 = vxor.u32 %v1055, 2147483648
    %v1059 = vmul.f32 %v1058, 1.442695
    %v1060 = vpow.pop %v1059
    %v1061 = vadd.f32 %v1060, 1.0
    %v1062 = vrcp.pop %v1061
    %v1063 = vmul.f32 1.0, %v1062
    %v1064 = vtanh.pop %v1055
    %v1065 = vmul.f32 %v1063, %v864
    %1067 = vrot.lane.b32.xlu0 %v1064, 64
    %v1068 = vpop.permute.xlu0 %1067
    %v1070 = vmul.f32 %v1063, %v1068
    %1072 = vrot.lane.b32.xlu0 %v1070, 32
    %v1073 = vpop.permute.xlu0 %1072
    %v1075 = vadd.f32 %v1065, %v1073
    %v1076 = vtanh.pop %v1075
    %1078 = vrot.lane.b32.xlu0 %v1076, 64
    %v1079 = vpop.permute.xlu0 %1078
    %v1081 = vmul.f32 %v1063, %v1079
    %1083 = vrot.lane.b32.xlu0 %v974, 32
    %v1084 = vpop.permute.xlu0 %1083
    %v1085 = vsel %vm132, %v1084, 0
    %1087 = vmatprep.subr.mxu0 0.0
    %1088 = vmatpush1.msra.mxu0 %v119
    %1089 = vmatprep.subr.mxu0 0.0
    %1090 = vmatpush1.msra.mxu0 %v120
    %1091 = vmatprep.subr.mxu0 0.0
    %1092 = vmatpush1.msra.mxu0 %v121
    %1093 = vmatprep.subr.mxu0 0.0
    %1094 = vmatpush1.msra.mxu0 %v122
    %1095 = vmatprep.subr.mxu0 0.0
    %1096 = vmatpush1.msra.mxu0 0.0
    %1097 = vmatprep.subr.mxu0 0.0
    %1098 = vmatpush1.msra.mxu0 0.0
    %1099 = vmatprep.subr.mxu0 0.0
    %1100 = vmatpush1.msra.mxu0 0.0
    %1101 = vmatprep.subr.mxu0 0.0
    %1102 = vmatpush1.msra.mxu0 0.0
    %1103 = vmatprep.subr.mxu0 0.0
    %1104 = vmatpush1.msra.mxu0 0.0
    %1105 = vmatprep.subr.mxu0 0.0
    %1106 = vmatpush1.msra.mxu0 0.0
    %1107 = vmatprep.subr.mxu0 0.0
    %1108 = vmatpush1.msra.mxu0 0.0
    %1109 = vmatprep.subr.mxu0 0.0
    %1110 = vmatpush1.msra.mxu0 0.0
    %1111 = vmatprep.subr.mxu0 0.0
    %1112 = vmatpush1.msra.mxu0 0.0
    %1113 = vmatprep.subr.mxu0 0.0
    %1114 = vmatpush1.msra.mxu0 0.0
    %1115 = vmatprep.subr.mxu0 0.0
    %1116 = vmatpush1.msra.mxu0 0.0
    %1117 = vmatprep.subr.mxu0 0.0
    %1118 = vmatpush1.msra.mxu0 0.0
    %1119 = vmatprep.subr.mxu0 0.0
    %1120 = vmatpush1.msra.mxu0 0.0
    %1121 = vmatprep.subr.mxu0 0.0
    %1122 = vmatpush1.msra.mxu0 0.0
    %1123 = vmatprep.subr.mxu0 0.0
    %1124 = vmatpush1.msra.mxu0 0.0
    %1125 = vmatprep.subr.mxu0 0.0
    %1126 = vmatpush1.msra.mxu0 0.0
    %1127 = vmatprep.subr.mxu0 0.0
    %1128 = vmatpush1.msra.mxu0 0.0
    %1129 = vmatprep.subr.mxu0 0.0
    %1130 = vmatpush1.msra.mxu0 0.0
    %1131 = vmatprep.subr.mxu0 0.0
    %1132 = vmatpush1.msra.mxu0 0.0
    %1133 = vmatprep.subr.mxu0 0.0
    %1134 = vmatpush1.msra.mxu0 0.0
    %1135 = vmatprep.subr.mxu0 0.0
    %1136 = vmatpush1.msra.mxu0 0.0
    %1137 = vmatprep.subr.mxu0 0.0
    %1138 = vmatpush1.msra.mxu0 0.0
    %1139 = vmatprep.subr.mxu0 0.0
    %1140 = vmatpush1.msra.mxu0 0.0
    %1141 = vmatprep.subr.mxu0 0.0
    %1142 = vmatpush1.msra.mxu0 0.0
    %1143 = vmatprep.subr.mxu0 0.0
    %1144 = vmatpush1.msra.mxu0 0.0
    %1145 = vmatprep.subr.mxu0 0.0
    %1146 = vmatpush1.msra.mxu0 0.0
    %1147 = vmatprep.subr.mxu0 0.0
    %1148 = vmatpush1.msra.mxu0 0.0
    %1149 = vmatprep.subr.mxu0 0.0
    %1150 = vmatpush1.msra.mxu0 0.0
    %1151 = vmatprep.mubr.f32.mxu0 0.0
    %1152 = vmatmul.mubr.f32.gmra.mrb[0].mxu0 %v1085
    %v1153 = vpop.f32.mrb[0].mxu0
    %v1154 = vadd.f32 0.0, %v1153
    %v1155 = vpop.f32.mrb[0].mxu0
    %1156 = vdwg.mxu0
    %v1158 = vrot.slane %v1154, 6
    %v1160 = vadd.f32 %v116, %v1158
    %v1161 = vxor.u32 %v1160, 2147483648
    %v1162 = vmul.f32 %v1161, 1.442695
    %v1163 = vpow.pop %v1162
    %v1164 = vadd.f32 %v1163, 1.0
    %v1165 = vrcp.pop %v1164
    %v1166 = vmul.f32 1.0, %v1165
    %v1167 = vtanh.pop %v1160
    %v1169 = vrot.slane %v968, 6
    %v1171 = vmul.f32 %v1166, %v1169
    %1173 = vrot.lane.b32.xlu0 %v1167, 64
    %v1174 = vpop.permute.xlu0 %1173
    %v1176 = vmul.f32 %v1166, %v1174
    %1178 = vrot.lane.b32.xlu0 %v1176, 32
    %v1179 = vpop.permute.xlu0 %1178
    %v1181 = vadd.f32 %v1171, %v1179
    %v1182 = vtanh.pop %v1181
    %1184 = vrot.lane.b32.xlu0 %v1182, 64
    %v1185 = vpop.permute.xlu0 %1184
    %v1187 = vmul.f32 %v1166, %v1185
    %1190 = vrot.lane.b32.xlu0 %v1081, 64
    %v1191 = vpop.permute.xlu0 %1190
    %v1193 = vsel %vm132, %v1084, %v1191
    %v1195 = vsel %vm345, %v1193, 0
    %1197 = vmatprep.subr.mxu0 0.0
    %1198 = vmatpush1.msra.mxu0 %v123
    %1199 = vmatprep.subr.mxu0 0.0
    %1200 = vmatpush1.msra.mxu0 %v124
    %1201 = vmatprep.subr.mxu0 0.0
    %1202 = vmatpush1.msra.mxu0 %v125
    %1203 = vmatprep.subr.mxu0 0.0
    %1204 = vmatpush1.msra.mxu0 %v126
    %1205 = vmatprep.subr.mxu0 0.0
    %1206 = vmatpush1.msra.mxu0 %v127
    %1207 = vmatprep.subr.mxu0 0.0
    %1208 = vmatpush1.msra.mxu0 %v128
    %1209 = vmatprep.subr.mxu0 0.0
    %1210 = vmatpush1.msra.mxu0 %v129
    %1211 = vmatprep.subr.mxu0 0.0
    %1212 = vmatpush1.msra.mxu0 %v130
    %1213 = vmatprep.subr.mxu0 0.0
    %1214 = vmatpush1.msra.mxu0 0.0
    %1215 = vmatprep.subr.mxu0 0.0
    %1216 = vmatpush1.msra.mxu0 0.0
    %1217 = vmatprep.subr.mxu0 0.0
    %1218 = vmatpush1.msra.mxu0 0.0
    %1219 = vmatprep.subr.mxu0 0.0
    %1220 = vmatpush1.msra.mxu0 0.0
    %1221 = vmatprep.subr.mxu0 0.0
    %1222 = vmatpush1.msra.mxu0 0.0
    %1223 = vmatprep.subr.mxu0 0.0
    %1224 = vmatpush1.msra.mxu0 0.0
    %1225 = vmatprep.subr.mxu0 0.0
    %1226 = vmatpush1.msra.mxu0 0.0
    %1227 = vmatprep.subr.mxu0 0.0
    %1228 = vmatpush1.msra.mxu0 0.0
    %1229 = vmatprep.subr.mxu0 0.0
    %1230 = vmatpush1.msra.mxu0 0.0
    %1231 = vmatprep.subr.mxu0 0.0
    %1232 = vmatpush1.msra.mxu0 0.0
    %1233 = vmatprep.subr.mxu0 0.0
    %1234 = vmatpush1.msra.mxu0 0.0
    %1235 = vmatprep.subr.mxu0 0.0
    %1236 = vmatpush1.msra.mxu0 0.0
    %1237 = vmatprep.subr.mxu0 0.0
    %1238 = vmatpush1.msra.mxu0 0.0
    %1239 = vmatprep.subr.mxu0 0.0
    %1240 = vmatpush1.msra.mxu0 0.0
    %1241 = vmatprep.subr.mxu0 0.0
    %1242 = vmatpush1.msra.mxu0 0.0
    %1243 = vmatprep.subr.mxu0 0.0
    %1244 = vmatpush1.msra.mxu0 0.0
    %1245 = vmatprep.subr.mxu0 0.0
    %1246 = vmatpush1.msra.mxu0 0.0
    %1247 = vmatprep.subr.mxu0 0.0
    %1248 = vmatpush1.msra.mxu0 0.0
    %1249 = vmatprep.subr.mxu0 0.0
    %1250 = vmatpush1.msra.mxu0 0.0
    %1251 = vmatprep.subr.mxu0 0.0
    %1252 = vmatpush1.msra.mxu0 0.0
    %1253 = vmatprep.subr.mxu0 0.0
    %1254 = vmatpush1.msra.mxu0 0.0
    %1255 = vmatprep.subr.mxu0 0.0
    %1256 = vmatpush1.msra.mxu0 0.0
    %1257 = vmatprep.subr.mxu0 0.0
    %1258 = vmatpush1.msra.mxu0 0.0
    %1259 = vmatprep.subr.mxu0 0.0
    %1260 = vmatpush1.msra.mxu0 0.0
    %1261 = vmatprep.mubr.f32.mxu0 0.0
    %1262 = vmatmul.mubr.f32.gmra.mrb[0].mxu0 %v1195
    %v1263 = vpop.f32.mrb[0].mxu0
    %v1264 = vadd.f32 %v343, %v1263
    %v1265 = vpop.f32.mrb[0].mxu0
    %1266 = vdwg.mxu0
    %v1267 = vxor.u32 %v1264, 2147483648
    %v1268 = vmul.f32 %v1267, 1.442695
    %v1269 = vpow.pop %v1268
    %v1270 = vadd.f32 %v1269, 1.0
    %v1271 = vrcp.pop %v1270
    %v1272 = vmul.f32 1.0, %v1271
    %v1273 = vtanh.pop %v1264
    %v1274 = vmul.f32 %v1272, %v1075
    %1276 = vrot.lane.b32.xlu0 %v1273, 64
    %v1277 = vpop.permute.xlu0 %1276
    %v1279 = vmul.f32 %v1272, %v1277
    %1281 = vrot.lane.b32.xlu0 %v1279, 32
    %v1282 = vpop.permute.xlu0 %1281
    %v1284 = vadd.f32 %v1274, %v1282
    %v1285 = vtanh.pop %v1284
    %1287 = vrot.lane.b32.xlu0 %v1285, 64
    %v1288 = vpop.permute.xlu0 %1287
    %v1290 = vmul.f32 %v1272, %v1288
    %v1292 = vrot.slane %v1187, 2
    %1293 = vrot.lane.b32.xlu0 %v1292, 32
    %v1294 = vpop.permute.xlu0 %1293
    %v1295 = vsel %vm132, %v1294, 0
    %1297 = vmatprep.subr.mxu0 0.0
    %1298 = vmatpush1.msra.mxu0 %v119
    %1299 = vmatprep.subr.mxu0 0.0
    %1300 = vmatpush1.msra.mxu0 %v120
    %1301 = vmatprep.subr.mxu0 0.0
    %1302 = vmatpush1.msra.mxu0 %v121
    %1303 = vmatprep.subr.mxu0 0.0
    %1304 = vmatpush1.msra.mxu0 %v122
    %1305 = vmatprep.subr.mxu0 0.0
    %1306 = vmatpush1.msra.mxu0 0.0
    %1307 = vmatprep.subr.mxu0 0.0
    %1308 = vmatpush1.msra.mxu0 0.0
    %1309 = vmatprep.subr.mxu0 0.0
    %1310 = vmatpush1.msra.mxu0 0.0
    %1311 = vmatprep.subr.mxu0 0.0
    %1312 = vmatpush1.msra.mxu0 0.0
    %1313 = vmatprep.subr.mxu0 0.0
    %1314 = vmatpush1.msra.mxu0 0.0
    %1315 = vmatprep.subr.mxu0 0.0
    %1316 = vmatpush1.msra.mxu0 0.0
    %1317 = vmatprep.subr.mxu0 0.0
    %1318 = vmatpush1.msra.mxu0 0.0
    %1319 = vmatprep.subr.mxu0 0.0
    %1320 = vmatpush1.msra.mxu0 0.0
    %1321 = vmatprep.subr.mxu0 0.0
    %1322 = vmatpush1.msra.mxu0 0.0
    %1323 = vmatprep.subr.mxu0 0.0
    %1324 = vmatpush1.msra.mxu0 0.0
    %1325 = vmatprep.subr.mxu0 0.0
    %1326 = vmatpush1.msra.mxu0 0.0
    %1327 = vmatprep.subr.mxu0 0.0
    %1328 = vmatpush1.msra.mxu0 0.0
    %1329 = vmatprep.subr.mxu0 0.0
    %1330 = vmatpush1.msra.mxu0 0.0
    %1331 = vmatprep.subr.mxu0 0.0
    %1332 = vmatpush1.msra.mxu0 0.0
    %1333 = vmatprep.subr.mxu0 0.0
    %1334 = vmatpush1.msra.mxu0 0.0
    %1335 = vmatprep.subr.mxu0 0.0
    %1336 = vmatpush1.msra.mxu0 0.0
    %1337 = vmatprep.subr.mxu0 0.0
    %1338 = vmatpush1.msra.mxu0 0.0
    %1339 = vmatprep.subr.mxu0 0.0
    %1340 = vmatpush1.msra.mxu0 0.0
    %1341 = vmatprep.subr.mxu0 0.0
    %1342 = vmatpush1.msra.mxu0 0.0
    %1343 = vmatprep.subr.mxu0 0.0
    %1344 = vmatpush1.msra.mxu0 0.0
    %1345 = vmatprep.subr.mxu0 0.0
    %1346 = vmatpush1.msra.mxu0 0.0
    %1347 = vmatprep.subr.mxu0 0.0
    %1348 = vmatpush1.msra.mxu0 0.0
    %1349 = vmatprep.subr.mxu0 0.0
    %1350 = vmatpush1.msra.mxu0 0.0
    %1351 = vmatprep.subr.mxu0 0.0
    %1352 = vmatpush1.msra.mxu0 0.0
    %1353 = vmatprep.subr.mxu0 0.0
    %1354 = vmatpush1.msra.mxu0 0.0
    %1355 = vmatprep.subr.mxu0 0.0
    %1356 = vmatpush1.msra.mxu0 0.0
    %1357 = vmatprep.subr.mxu0 0.0
    %1358 = vmatpush1.msra.mxu0 0.0
    %1359 = vmatprep.subr.mxu0 0.0
    %1360 = vmatpush1.msra.mxu0 0.0
    %1361 = vmatprep.mubr.f32.mxu0 0.0
    %1362 = vmatmul.mubr.f32.gmra.mrb[0].mxu0 %v1295
    %v1363 = vpop.f32.mrb[0].mxu0
    %v1364 = vadd.f32 0.0, %v1363
    %v1365 = vpop.f32.mrb[0].mxu0
    %1366 = vdwg.mxu0
    %v1368 = vrot.slane %v1364, 4
    %v1370 = vadd.f32 %v116, %v1368
    %v1371 = vxor.u32 %v1370, 2147483648
    %v1372 = vmul.f32 %v1371, 1.442695
    %v1373 = vpow.pop %v1372
    %v1374 = vadd.f32 %v1373, 1.0
    %v1375 = vrcp.pop %v1374
    %v1376 = vmul.f32 1.0, %v1375
    %v1377 = vtanh.pop %v1370
    %v1379 = vrot.slane %v1181, 6
    %v1381 = vmul.f32 %v1376, %v1379
    %1383 = vrot.lane.b32.xlu0 %v1377, 64
    %v1384 = vpop.permute.xlu0 %1383
    %v1386 = vmul.f32 %v1376, %v1384
    %1388 = vrot.lane.b32.xlu0 %v1386, 32
    %v1389 = vpop.permute.xlu0 %1388
    %v1391 = vadd.f32 %v1381, %v1389
    %v1392 = vtanh.pop %v1391
    %1394 = vrot.lane.b32.xlu0 %v1392, 64
    %v1395 = vpop.permute.xlu0 %1394
    %v1397 = vmul.f32 %v1376, %v1395
    %1398 = vrot.lane.b32.xlu0 %v1187, 32
    %v1399 = vpop.permute.xlu0 %1398
    %v1402 = vrot.slane %v1290, 6
    %1403 = vrot.lane.b32.xlu0 %v1402, 64
    %v1404 = vpop.permute.xlu0 %1403
    %v1406 = vsel %vm132, %v1399, %v1404
    %v1408 = vrot.slane %v1406, 2
    %v1409 = vsel %vm345, %v1408, 0
    %1411 = vmatprep.subr.mxu0 0.0
    %1412 = vmatpush1.msra.mxu0 %v123
    %1413 = vmatprep.subr.mxu0 0.0
    %1414 = vmatpush1.msra.mxu0 %v124
    %1415 = vmatprep.subr.mxu0 0.0
    %1416 = vmatpush1.msra.mxu0 %v125
    %1417 = vmatprep.subr.mxu0 0.0
    %1418 = vmatpush1.msra.mxu0 %v126
    %1419 = vmatprep.subr.mxu0 0.0
    %1420 = vmatpush1.msra.mxu0 %v127
    %1421 = vmatprep.subr.mxu0 0.0
    %1422 = vmatpush1.msra.mxu0 %v128
    %1423 = vmatprep.subr.mxu0 0.0
    %1424 = vmatpush1.msra.mxu0 %v129
    %1425 = vmatprep.subr.mxu0 0.0
    %1426 = vmatpush1.msra.mxu0 %v130
    %1427 = vmatprep.subr.mxu0 0.0
    %1428 = vmatpush1.msra.mxu0 0.0
    %1429 = vmatprep.subr.mxu0 0.0
    %1430 = vmatpush1.msra.mxu0 0.0
    %1431 = vmatprep.subr.mxu0 0.0
    %1432 = vmatpush1.msra.mxu0 0.0
    %1433 = vmatprep.subr.mxu0 0.0
    %1434 = vmatpush1.msra.mxu0 0.0
    %1435 = vmatprep.subr.mxu0 0.0
    %1436 = vmatpush1.msra.mxu0 0.0
    %1437 = vmatprep.subr.mxu0 0.0
    %1438 = vmatpush1.msra.mxu0 0.0
    %1439 = vmatprep.subr.mxu0 0.0
    %1440 = vmatpush1.msra.mxu0 0.0
    %1441 = vmatprep.subr.mxu0 0.0
    %1442 = vmatpush1.msra.mxu0 0.0
    %1443 = vmatprep.subr.mxu0 0.0
    %1444 = vmatpush1.msra.mxu0 0.0
    %1445 = vmatprep.subr.mxu0 0.0
    %1446 = vmatpush1.msra.mxu0 0.0
    %1447 = vmatprep.subr.mxu0 0.0
    %1448 = vmatpush1.msra.mxu0 0.0
    %1449 = vmatprep.subr.mxu0 0.0
    %1450 = vmatpush1.msra.mxu0 0.0
    %1451 = vmatprep.subr.mxu0 0.0
    %1452 = vmatpush1.msra.mxu0 0.0
    %1453 = vmatprep.subr.mxu0 0.0
    %1454 = vmatpush1.msra.mxu0 0.0
    %1455 = vmatprep.subr.mxu0 0.0
    %1456 = vmatpush1.msra.mxu0 0.0
    %1457 = vmatprep.subr.mxu0 0.0
    %1458 = vmatpush1.msra.mxu0 0.0
    %1459 = vmatprep.subr.mxu0 0.0
    %1460 = vmatpush1.msra.mxu0 0.0
    %1461 = vmatprep.subr.mxu0 0.0
    %1462 = vmatpush1.msra.mxu0 0.0
    %1463 = vmatprep.subr.mxu0 0.0
    %1464 = vmatpush1.msra.mxu0 0.0
    %1465 = vmatprep.subr.mxu0 0.0
    %1466 = vmatpush1.msra.mxu0 0.0
    %1467 = vmatprep.subr.mxu0 0.0
    %1468 = vmatpush1.msra.mxu0 0.0
    %1469 = vmatprep.subr.mxu0 0.0
    %1470 = vmatpush1.msra.mxu0 0.0
    %1471 = vmatprep.subr.mxu0 0.0
    %1472 = vmatpush1.msra.mxu0 0.0
    %1473 = vmatprep.subr.mxu0 0.0
    %1474 = vmatpush1.msra.mxu0 0.0
    %1475 = vmatprep.mubr.f32.mxu0 0.0
    %1476 = vmatmul.mubr.f32.gmra.mrb[0].mxu0 %v1409
    %v1477 = vpop.f32.mrb[0].mxu0
    %v1478 = vadd.f32 %v343, %v1477
    %v1479 = vpop.f32.mrb[0].mxu0
    %1480 = vdwg.mxu0
    %v1481 = vxor.u32 %v1478, 2147483648
    %v1482 = vmul.f32 %v1481, 1.442695
    %v1483 = vpow.pop %v1482
    %v1484 = vadd.f32 %v1483, 1.0
    %v1485 = vrcp.pop %v1484
    %v1486 = vmul.f32 1.0, %v1485
    %v1487 = vtanh.pop %v1478
    %v1488 = vmul.f32 %v1486, %v1284
    %1490 = vrot.lane.b32.xlu0 %v1487, 64
    %v1491 = vpop.permute.xlu0 %1490
    %v1493 = vmul.f32 %v1486, %v1491
    %1495 = vrot.lane.b32.xlu0 %v1493, 32
    %v1496 = vpop.permute.xlu0 %1495
    %v1498 = vadd.f32 %v1488, %v1496
    %v1499 = vtanh.pop %v1498
    %1501 = vrot.lane.b32.xlu0 %v1499, 64
    %v1502 = vpop.permute.xlu0 %1501
    %v1504 = vmul.f32 %v1486, %v1502
    %v1506 = vrot.slane %v1397, 4
    %1507 = vrot.lane.b32.xlu0 %v1506, 32
    %v1508 = vpop.permute.xlu0 %1507
    %v1509 = vsel %vm132, %v1508, 0
    %1511 = vmatprep.subr.mxu0 0.0
    %1512 = vmatpush1.msra.mxu0 %v119
    %1513 = vmatprep.subr.mxu0 0.0
    %1514 = vmatpush1.msra.mxu0 %v120
    %1515 = vmatprep.subr.mxu0 0.0
    %1516 = vmatpush1.msra.mxu0 %v121
    %1517 = vmatprep.subr.mxu0 0.0
    %1518 = vmatpush1.msra.mxu0 %v122
    %1519 = vmatprep.subr.mxu0 0.0
    %1520 = vmatpush1.msra.mxu0 0.0
    %1521 = vmatprep.subr.mxu0 0.0
    %1522 = vmatpush1.msra.mxu0 0.0
    %1523 = vmatprep.subr.mxu0 0.0
    %1524 = vmatpush1.msra.mxu0 0.0
    %1525 = vmatprep.subr.mxu0 0.0
    %1526 = vmatpush1.msra.mxu0 0.0
    %1527 = vmatprep.subr.mxu0 0.0
    %1528 = vmatpush1.msra.mxu0 0.0
    %1529 = vmatprep.subr.mxu0 0.0
    %1530 = vmatpush1.msra.mxu0 0.0
    %1531 = vmatprep.subr.mxu0 0.0
    %1532 = vmatpush1.msra.mxu0 0.0
    %1533 = vmatprep.subr.mxu0 0.0
    %1534 = vmatpush1.msra.mxu0 0.0
    %1535 = vmatprep.subr.mxu0 0.0
    %1536 = vmatpush1.msra.mxu0 0.0
    %1537 = vmatprep.subr.mxu0 0.0
    %1538 = vmatpush1.msra.mxu0 0.0
    %1539 = vmatprep.subr.mxu0 0.0
    %1540 = vmatpush1.msra.mxu0 0.0
    %1541 = vmatprep.subr.mxu0 0.0
    %1542 = vmatpush1.msra.mxu0 0.0
    %1543 = vmatprep.subr.mxu0 0.0
    %1544 = vmatpush1.msra.mxu0 0.0
    %1545 = vmatprep.subr.mxu0 0.0
    %1546 = vmatpush1.msra.mxu0 0.0
    %1547 = vmatprep.subr.mxu0 0.0
    %1548 = vmatpush1.msra.mxu0 0.0
    %1549 = vmatprep.subr.mxu0 0.0
    %1550 = vmatpush1.msra.mxu0 0.0
    %1551 = vmatprep.subr.mxu0 0.0
    %1552 = vmatpush1.msra.mxu0 0.0
    %1553 = vmatprep.subr.mxu0 0.0
    %1554 = vmatpush1.msra.mxu0 0.0
    %1555 = vmatprep.subr.mxu0 0.0
    %1556 = vmatpush1.msra.mxu0 0.0
    %1557 = vmatprep.subr.mxu0 0.0
    %1558 = vmatpush1.msra.mxu0 0.0
    %1559 = vmatprep.subr.mxu0 0.0
    %1560 = vmatpush1.msra.mxu0 0.0
    %1561 = vmatprep.subr.mxu0 0.0
    %1562 = vmatpush1.msra.mxu0 0.0
    %1563 = vmatprep.subr.mxu0 0.0
    %1564 = vmatpush1.msra.mxu0 0.0
    %1565 = vmatprep.subr.mxu0 0.0
    %1566 = vmatpush1.msra.mxu0 0.0
    %1567 = vmatprep.subr.mxu0 0.0
    %1568 = vmatpush1.msra.mxu0 0.0
    %1569 = vmatprep.subr.mxu0 0.0
    %1570 = vmatpush1.msra.mxu0 0.0
    %1571 = vmatprep.subr.mxu0 0.0
    %1572 = vmatpush1.msra.mxu0 0.0
    %1573 = vmatprep.subr.mxu0 0.0
    %1574 = vmatpush1.msra.mxu0 0.0
    %1575 = vmatprep.mubr.f32.mxu0 0.0
    %1576 = vmatmul.mubr.f32.gmra.mrb[0].mxu0 %v1509
    %v1577 = vpop.f32.mrb[0].mxu0
    %v1578 = vadd.f32 0.0, %v1577
    %v1579 = vpop.f32.mrb[0].mxu0
    %1580 = vdwg.mxu0
    %v1582 = vrot.slane %v1578, 2
    %v1584 = vadd.f32 %v116, %v1582
    %v1585 = vxor.u32 %v1584, 2147483648
    %v1586 = vmul.f32 %v1585, 1.442695
    %v1587 = vpow.pop %v1586
    %v1588 = vadd.f32 %v1587, 1.0
    %v1589 = vrcp.pop %v1588
    %v1590 = vmul.f32 1.0, %v1589
    %v1591 = vtanh.pop %v1584
    %v1593 = vrot.slane %v1391, 6
    %v1595 = vmul.f32 %v1590, %v1593
    %1597 = vrot.lane.b32.xlu0 %v1591, 64
    %v1598 = vpop.permute.xlu0 %1597
    %v1600 = vmul.f32 %v1590, %v1598
    %1602 = vrot.lane.b32.xlu0 %v1600, 32
    %v1603 = vpop.permute.xlu0 %1602
    %v1605 = vadd.f32 %v1595, %v1603
    %v1606 = vtanh.pop %v1605
    %1608 = vrot.lane.b32.xlu0 %v1606, 64
    %v1609 = vpop.permute.xlu0 %1608
    %v1611 = vmul.f32 %v1590, %v1609
    %1612 = vrot.lane.b32.xlu0 %v1397, 32
    %v1613 = vpop.permute.xlu0 %1612
    %v1616 = vrot.slane %v1504, 4
    %1617 = vrot.lane.b32.xlu0 %v1616, 64
    %v1618 = vpop.permute.xlu0 %1617
    %v1620 = vsel %vm132, %v1613, %v1618
    %v1622 = vrot.slane %v1620, 4
    %v1623 = vsel %vm345, %v1622, 0
    %1625 = vmatprep.subr.mxu0 0.0
    %1626 = vmatpush1.msra.mxu0 %v123
    %1627 = vmatprep.subr.mxu0 0.0
    %1628 = vmatpush1.msra.mxu0 %v124
    %1629 = vmatprep.subr.mxu0 0.0
    %1630 = vmatpush1.msra.mxu0 %v125
    %1631 = vmatprep.subr.mxu0 0.0
    %1632 = vmatpush1.msra.mxu0 %v126
    %1633 = vmatprep.subr.mxu0 0.0
    %1634 = vmatpush1.msra.mxu0 %v127
    %1635 = vmatprep.subr.mxu0 0.0
    %1636 = vmatpush1.msra.mxu0 %v128
    %1637 = vmatprep.subr.mxu0 0.0
    %1638 = vmatpush1.msra.mxu0 %v129
    %1639 = vmatprep.subr.mxu0 0.0
    %1640 = vmatpush1.msra.mxu0 %v130
    %1641 = vmatprep.subr.mxu0 0.0
    %1642 = vmatpush1.msra.mxu0 0.0
    %1643 = vmatprep.subr.mxu0 0.0
    %1644 = vmatpush1.msra.mxu0 0.0
    %1645 = vmatprep.subr.mxu0 0.0
    %1646 = vmatpush1.msra.mxu0 0.0
    %1647 = vmatprep.subr.mxu0 0.0
    %1648 = vmatpush1.msra.mxu0 0.0
    %1649 = vmatprep.subr.mxu0 0.0
    %1650 = vmatpush1.msra.mxu0 0.0
    %1651 = vmatprep.subr.mxu0 0.0
    %1652 = vmatpush1.msra.mxu0 0.0
    %1653 = vmatprep.subr.mxu0 0.0
    %1654 = vmatpush1.msra.mxu0 0.0
    %1655 = vmatprep.subr.mxu0 0.0
    %1656 = vmatpush1.msra.mxu0 0.0
    %1657 = vmatprep.subr.mxu0 0.0
    %1658 = vmatpush1.msra.mxu0 0.0
    %1659 = vmatprep.subr.mxu0 0.0
    %1660 = vmatpush1.msra.mxu0 0.0
    %1661 = vmatprep.subr.mxu0 0.0
    %1662 = vmatpush1.msra.mxu0 0.0
    %1663 = vmatprep.subr.mxu0 0.0
    %1664 = vmatpush1.msra.mxu0 0.0
    %1665 = vmatprep.subr.mxu0 0.0
    %1666 = vmatpush1.msra.mxu0 0.0
    %1667 = vmatprep.subr.mxu0 0.0
    %1668 = vmatpush1.msra.mxu0 0.0
    %1669 = vmatprep.subr.mxu0 0.0
    %1670 = vmatpush1.msra.mxu0 0.0
    %1671 = vmatprep.subr.mxu0 0.0
    %1672 = vmatpush1.msra.mxu0 0.0
    %1673 = vmatprep.subr.mxu0 0.0
    %1674 = vmatpush1.msra.mxu0 0.0
    %1675 = vmatprep.subr.mxu0 0.0
    %1676 = vmatpush1.msra.mxu0 0.0
    %1677 = vmatprep.subr.mxu0 0.0
    %1678 = vmatpush1.msra.mxu0 0.0
    %1679 = vmatprep.subr.mxu0 0.0
    %1680 = vmatpush1.msra.mxu0 0.0
    %1681 = vmatprep.subr.mxu0 0.0
    %1682 = vmatpush1.msra.mxu0 0.0
    %1683 = vmatprep.subr.mxu0 0.0
    %1684 = vmatpush1.msra.mxu0 0.0
    %1685 = vmatprep.subr.mxu0 0.0
    %1686 = vmatpush1.msra.mxu0 0.0
    %1687 = vmatprep.subr.mxu0 0.0
    %1688 = vmatpush1.msra.mxu0 0.0
    %1689 = vmatprep.mubr.f32.mxu0 0.0
    %1690 = vmatmul.mubr.f32.gmra.mrb[0].mxu0 %v1623
    %v1691 = vpop.f32.mrb[0].mxu0
    %v1692 = vadd.f32 %v343, %v1691
    %v1693 = vpop.f32.mrb[0].mxu0
    %1694 = vdwg.mxu0
    %v1695 = vxor.u32 %v1692, 2147483648
    %v1696 = vmul.f32 %v1695, 1.442695
    %v1697 = vpow.pop %v1696
    %v1698 = vadd.f32 %v1697, 1.0
    %v1699 = vrcp.pop %v1698
    %v1700 = vmul.f32 1.0, %v1699
    %v1701 = vtanh.pop %v1692
    %v1702 = vmul.f32 %v1700, %v1498
    %1704 = vrot.lane.b32.xlu0 %v1701, 64
    %v1705 = vpop.permute.xlu0 %1704
    %v1707 = vmul.f32 %v1700, %v1705
    %1709 = vrot.lane.b32.xlu0 %v1707, 32
    %v1710 = vpop.permute.xlu0 %1709
    %v1712 = vadd.f32 %v1702, %v1710
    %v1713 = vtanh.pop %v1712
    %1715 = vrot.lane.b32.xlu0 %v1713, 64
    %v1716 = vpop.permute.xlu0 %1715
    %v1718 = vmul.f32 %v1700, %v1716
    %1720 = vrot.lane.b32.xlu0 %v1611, 32
    %v1721 = vpop.permute.xlu0 %1720
    %v1724 = vrot.slane %v1718, 2
    %1725 = vrot.lane.b32.xlu0 %v1724, 64
    %v1726 = vpop.permute.xlu0 %1725
    %v1728 = vsel %vm132, %v1721, %v1726
    %v1730 = vrot.slane %v1728, 6
    %v1731 = vsel %vm345, %v1730, 0
    %1733 = vmatprep.subr.mxu0 0.0
    %1734 = vmatpush1.msra.mxu0 %v123
    %1735 = vmatprep.subr.mxu0 0.0
    %1736 = vmatpush1.msra.mxu0 %v124
    %1737 = vmatprep.subr.mxu0 0.0
    %1738 = vmatpush1.msra.mxu0 %v125
    %1739 = vmatprep.subr.mxu0 0.0
    %1740 = vmatpush1.msra.mxu0 %v126
    %1741 = vmatprep.subr.mxu0 0.0
    %1742 = vmatpush1.msra.mxu0 %v127
    %1743 = vmatprep.subr.mxu0 0.0
    %1744 = vmatpush1.msra.mxu0 %v128
    %1745 = vmatprep.subr.mxu0 0.0
    %1746 = vmatpush1.msra.mxu0 %v129
    %1747 = vmatprep.subr.mxu0 0.0
    %1748 = vmatpush1.msra.mxu0 %v130
    %1749 = vmatprep.subr.mxu0 0.0
    %1750 = vmatpush1.msra.mxu0 0.0
    %1751 = vmatprep.subr.mxu0 0.0
    %1752 = vmatpush1.msra.mxu0 0.0
    %1753 = vmatprep.subr.mxu0 0.0
    %1754 = vmatpush1.msra.mxu0 0.0
    %1755 = vmatprep.subr.mxu0 0.0
    %1756 = vmatpush1.msra.mxu0 0.0
    %1757 = vmatprep.subr.mxu0 0.0
    %1758 = vmatpush1.msra.mxu0 0.0
    %1759 = vmatprep.subr.mxu0 0.0
    %1760 = vmatpush1.msra.mxu0 0.0
    %1761 = vmatprep.subr.mxu0 0.0
    %1762 = vmatpush1.msra.mxu0 0.0
    %1763 = vmatprep.subr.mxu0 0.0
    %1764 = vmatpush1.msra.mxu0 0.0
    %1765 = vmatprep.subr.mxu0 0.0
    %1766 = vmatpush1.msra.mxu0 0.0
    %1767 = vmatprep.subr.mxu0 0.0
    %1768 = vmatpush1.msra.mxu0 0.0
    %1769 = vmatprep.subr.mxu0 0.0
    %1770 = vmatpush1.msra.mxu0 0.0
    %1771 = vmatprep.subr.mxu0 0.0
    %1772 = vmatpush1.msra.mxu0 0.0
    %1773 = vmatprep.subr.mxu0 0.0
    %1774 = vmatpush1.msra.mxu0 0.0
    %1775 = vmatprep.subr.mxu0 0.0
    %1776 = vmatpush1.msra.mxu0 0.0
    %1777 = vmatprep.subr.mxu0 0.0
    %1778 = vmatpush1.msra.mxu0 0.0
    %1779 = vmatprep.subr.mxu0 0.0
    %1780 = vmatpush1.msra.mxu0 0.0
    %1781 = vmatprep.subr.mxu0 0.0
    %1782 = vmatpush1.msra.mxu0 0.0
    %1783 = vmatprep.subr.mxu0 0.0
    %1784 = vmatpush1.msra.mxu0 0.0
    %1785 = vmatprep.subr.mxu0 0.0
    %1786 = vmatpush1.msra.mxu0 0.0
    %1787 = vmatprep.subr.mxu0 0.0
    %1788 = vmatpush1.msra.mxu0 0.0
    %1789 = vmatprep.subr.mxu0 0.0
    %1790 = vmatpush1.msra.mxu0 0.0
    %1791 = vmatprep.subr.mxu0 0.0
    %1792 = vmatpush1.msra.mxu0 0.0
    %1793 = vmatprep.subr.mxu0 0.0
    %1794 = vmatpush1.msra.mxu0 0.0
    %1795 = vmatprep.subr.mxu0 0.0
    %1796 = vmatpush1.msra.mxu0 0.0
    %1797 = vmatprep.mubr.f32.mxu0 0.0
    %1798 = vmatmul.mubr.f32.gmra.mrb[0].mxu0 %v1731
    %v1799 = vpop.f32.mrb[0].mxu0
    %v1800 = vadd.f32 %v343, %v1799
    %v1801 = vpop.f32.mrb[0].mxu0
    %1802 = vdwg.mxu0
    %v1803 = vxor.u32 %v1800, 2147483648
    %v1804 = vmul.f32 %v1803, 1.442695
    %v1805 = vpow.pop %v1804
    %v1806 = vadd.f32 %v1805, 1.0
    %v1807 = vrcp.pop %v1806
    %v1808 = vmul.f32 1.0, %v1807
    %v1809 = vtanh.pop %v1800
    %v1810 = vmul.f32 %v1808, %v1712
    %1812 = vrot.lane.b32.xlu0 %v1809, 64
    %v1813 = vpop.permute.xlu0 %1812
    %v1815 = vmul.f32 %v1808, %v1813
    %1817 = vrot.lane.b32.xlu0 %v1815, 32
    %v1818 = vpop.permute.xlu0 %1817
    %v1820 = vadd.f32 %v1810, %v1818
    %v1821 = vtanh.pop %v1820
    %1823 = vrot.lane.b32.xlu0 %v1821, 64
    %v1824 = vpop.permute.xlu0 %1823
    %v1826 = vmul.f32 %v1808, %v1824
    %v1827 = vrot.slane %v656, 6
    %v1829 = vrot.slane %v870, 4
    %v1831 = vrot.slane %v1081, 2
    %v1833 = vrot.slane %v1504, 6
    %v1835 = vrot.slane %v1718, 4
    %v1838 = vrot.slane %v1826, 2
    %vm1840 = vcmask 1041408
    %v1841 = vsel %vm1840, %v442, %v1827
    %vm1842 = vcmask 1043456
    %v1843 = vsel %vm1842, %v1841, %v1829
    %vm1844 = vcmask 1045504
    %v1845 = vsel %vm1844, %v1843, %v1831
    %v1846 = vsel %vm1840, %v1290, %v1833
    %v1847 = vsel %vm1842, %v1846, %v1835
    %v1848 = vsel %vm1844, %v1847, %v1838
    %1851 = vrot.lane.b32.xlu0 %v1845, 32
    %v1852 = vpop.permute.xlu0 %1851
    %1853 = vrot.lane.b32.xlu0 %v1848, 32
    %v1854 = vpop.permute.xlu0 %1853
    %1857 = vst.msk [vmem:[#allocation2] sm:$0xff] %vm132, %v1852
    %1858 = vst.msk [vmem:[#allocation2 + $0x8] sm:$0xff] %vm132, %v1854
    %v1859 = vrot.slane %v1611, 6
    %v1861 = vrot.slane %v1826, 6
    %v1864 = vrot.slane %v1605, 2
    %1865 = vrot.lane.b32.xlu0 %v1864, 64
    %v1866 = vpop.permute.xlu0 %1865
    %v1869 = vrot.slane %v1820, 2
    %1870 = vrot.lane.b32.xlu0 %v1869, 64
    %v1871 = vpop.permute.xlu0 %1870
    %v1873 = vsel %vm1840, %v1859, %v1861
    %v1874 = vsel %vm1842, %v1873, %v1866
    %v1875 = vsel %vm1844, %v1874, %v1871
    %1877 = vrot.lane.b32.xlu0 %v1875, 32
    %v1878 = vpop.permute.xlu0 %1877
    %1880 = vst.msk [vmem:[%s7] sm:$0xff] %vm132, %v1878
    // Predicated region
    $region26: #{lstm_model_forward.1} parent=1 // pred_check
      _
    $region27: #{lstm_model_forward.1} parent=1 // pred_check_branch
      %1882 = sbr.rel (0) target = $region29
    $region28: #{lstm_model_forward.1} parent=1 // pred_region
      %s1884 = ssub.s32 256, 256
      %1885 = vsyncadd [#allocation3], %s1884
      %s1886 = sshll.u32 [#allocation2], 4
      %s1887 = int_to_ptr.vmem [resolvable:$true] %s1886
      %1892 = dma.vmem_to_hbm [thread:$0]  %s1887, 256, %s6, [#allocation3], 128, 128, 8
    $region29: #{lstm_model_forward.1} parent=1 // pred_fallthru
      _
    // Predicated region
    $region30: #{lstm_model_forward.1} parent=1 // pred_check
      _
    $region31: #{lstm_model_forward.1} parent=1 // pred_check_branch
      %1894 = sbr.rel (0) target = $region33
    $region32: #{lstm_model_forward.1} parent=1 // pred_region
      _
    $region33: #{lstm_model_forward.1} parent=1 // pred_fallthru
      _
    // Predicated region
    $region34: #{lstm_model_forward.1} parent=1 // pred_check
      _
    $region35: #{lstm_model_forward.1} parent=1 // pred_check_branch
      %1896 = sbr.rel (0) target = $region37
    $region36: #{lstm_model_forward.1} parent=1 // pred_region
      %1897 = dma.done [#allocation3], 256
    $region37: #{lstm_model_forward.1} parent=1 // pred_fallthru
      _
    // Predicated region
    $region38: #{lstm_model_forward.1} parent=1 // pred_check
      _
    $region39: #{lstm_model_forward.1} parent=1 // pred_check_branch
      %1899 = sbr.rel (0) target = $region41
    $region40: #{lstm_model_forward.1} parent=1 // pred_region
      _
    $region41: #{lstm_model_forward.1} parent=1 // pred_fallthru
      _
    %1900 = vsyncpa [#allocation3], 1

</llo_original>
